<compile_context>
chip_gen: v5e
topology: v5e:2x2
jax: 0.10.0
libtpu: 0.0.40
codegen_flags: <defaults>
</compile_context>

<pallas_src>
import functools

import numpy as np
import jax
import jax.numpy as jnp
from jax.experimental import pallas as pl
from jax.experimental.pallas import tpu as pltpu

EPS = 1e-5


# ----------------------------------------------------------------------------- glue helpers
def matrix_r_ex(L, d_model):
    """matrixR(L, d_model, ex=True) from the PyTorch script."""
    inv_freq = 1.0 / (10000.0 ** (jnp.arange(0.0, d_model, 2.0) / d_model))
    pos = jnp.arange(-L + 1.0, L + 0.0)                     # 2L-1 relative positions
    sinusoid = jnp.outer(pos, inv_freq)                     # (2L-1, d/2)
    mat = jnp.zeros((2 * L - 1, d_model), jnp.float32)
    mat = mat.at[:, 0::2].set(jnp.sin(sinusoid))
    mat = mat.at[:, 1::2].set(jnp.cos(sinusoid))
    return mat


def _pick_tile(dim, prefs):
    """Largest preferred tile that evenly divides `dim`; fall back to the full dim."""
    for p in prefs:
        if dim % p == 0:
            return p
    return dim


# ----------------------------------------------------------------------------- tiled matmul
def _matmul_kernel(x_ref, w_ref, o_ref, acc_ref):
    @pl.when(pl.program_id(2) == 0)
    def _():
        acc_ref[...] = jnp.zeros_like(acc_ref)

    acc_ref[...] += jnp.dot(x_ref[...], w_ref[...], preferred_element_type=jnp.float32)

    @pl.when(pl.program_id(2) == pl.num_programs(2) - 1)
    def _():
        o_ref[...] = acc_ref[...]


def pallas_matmul(x, w):
    M, K = x.shape
    _, N = w.shape
    tm = _pick_tile(M, (256, 128, 8))
    tn = _pick_tile(N, (256, 128))
    tk = _pick_tile(K, (512, 256, 128))
    return pl.pallas_call(
        _matmul_kernel,
        out_shape=jax.ShapeDtypeStruct((M, N), jnp.float32),
        grid=(M // tm, N // tn, K // tk),
        in_specs=[pl.BlockSpec((tm, tk), lambda i, j, k: (i, k)),
                  pl.BlockSpec((tk, tn), lambda i, j, k: (k, j))],
        out_specs=pl.BlockSpec((tm, tn), lambda i, j, k: (i, j)),
        scratch_shapes=[pltpu.VMEM((tm, tn), jnp.float32)],
        compiler_params=pltpu.CompilerParams(
            dimension_semantics=("parallel", "parallel", "arbitrary")),
    )(x, w)


# ----------------------------------------------------------------------------- relative attention
def _rel_attn_kernel(qkv_ref, rq_ref, cb_ref, pb_ref, o_ref, *, h, H, L, d):
    qkv = qkv_ref[...]          # (L, 3d)  rows of one batch element: [q | k | v] columns
    rq = rq_ref[...]            # (2L-1, d) relative table projection (resident)
    cb = cb_ref[...]            # (1, d)
    pb = pb_ref[...]            # (1, d)

    # shift_rows doubles the main diagonal -> factor (1 + eye), built with 2-D iota.
    rows = jax.lax.broadcasted_iota(jnp.int32, (L, L), 0)
    cols = jax.lax.broadcasted_iota(jnp.int32, (L, L), 1)
    fac = 1.0 + (rows == cols).astype(jnp.float32)

    outs = []
    for hh in range(h):                                  # static unroll over heads
        lo, hi = hh * H, (hh + 1) * H
        q = qkv[:, lo:hi]                                # (L, H)
        k = qkv[:, d + lo:d + hi]                        # (L, H)
        v = qkv[:, 2 * d + lo:2 * d + hi]                # (L, H)
        qc = q + cb[:, lo:hi]                            # content bias folded into queries
        qp = q + pb[:, lo:hi]                            # positional bias folded into queries

        # A_a + A_c  (MXU):  (q+cb) @ k^T
        ac = jax.lax.dot_general(qc, k, (((1,), (1,)), ((), ())),
                                 preferred_element_type=jnp.float32)       # (L, L)

        # relative scores on the MXU:  (q+pb) @ Qh^T  -> (L, 2L-1)
        rel = jax.lax.dot_general(qp, rq[:, lo:hi], (((1,), (1,)), ((), ())),
                                  preferred_element_type=jnp.float32)

        # shift_rows:  bd[i, k] = rel[i, k - i + L - 1]   (O(L^2), static slices)
        # TODO(synk): for large L replace this static unroll with a strided
        #             pltpu.roll on the (L, 2L-1) score matrix.
        bd = jnp.concatenate(
            [rel[i:i + 1, L - 1 - i:2 * L - 1 - i] for i in range(L)], axis=0)   # (L, L)

        a = ac + fac * bd
        a = a - jnp.max(a, axis=-1, keepdims=True)
        e = jnp.exp(a)
        p = e * pl.reciprocal(jnp.sum(e, axis=-1, keepdims=True), approx=True)   # softmax

        outs.append(jnp.dot(p, v, preferred_element_type=jnp.float32))           # (L, H)

    # heads concatenated along columns -> one lane-dense (L, d) store, already in the
    # layout the Wo-projection epilogue consumes (no transpose round-trip through HBM).
    o_ref[...] = jnp.concatenate(outs, axis=-1)


def pallas_rel_attention(qkv, rq, cb, pb, *, N, L, d, h):
    H = d // h
    kern = functools.partial(_rel_attn_kernel, h=h, H=H, L=L, d=d)
    return pl.pallas_call(
        kern,
        out_shape=jax.ShapeDtypeStruct((N * L, d), jnp.float32),
        grid=(N,),
        in_specs=[
            pl.BlockSpec((L, 3 * d), lambda n: (n, 0)),        # q|k|v rows of batch n
            pl.BlockSpec((2 * L - 1, d), lambda n: (0, 0)),    # relative table (constant index)
            pl.BlockSpec((1, d), lambda n: (0, 0)),
            pl.BlockSpec((1, d), lambda n: (0, 0)),
        ],
        out_specs=pl.BlockSpec((L, d), lambda n: (n, 0)),
        compiler_params=pltpu.CompilerParams(dimension_semantics=("parallel",)),
    )(qkv, rq, cb.reshape(1, d), pb.reshape(1, d))


# ----------------------------------------------------------------------------- epilogues
def _proj_residual_ln_kernel(x_ref, o_ref, w_ref, b_ref, g_ref, beta_ref, y_ref):
    y = (x_ref[...]
         + jnp.dot(o_ref[...], w_ref[...], preferred_element_type=jnp.float32)
         + b_ref[...])
    mu = jnp.mean(y, axis=-1, keepdims=True)
    var = jnp.mean(jnp.square(y - mu), axis=-1, keepdims=True)
    y_ref[...] = (y - mu) * jax.lax.rsqrt(var + EPS) * g_ref[...] + beta_ref[...]


def pallas_proj_residual_ln(x, o, w, b, g, beta):
    M, dd = x.shape
    tm = _pick_tile(M, (512, 256, 128, 8))
    row = pl.BlockSpec((tm, dd), lambda i: (i, 0))
    const = lambda shape: pl.BlockSpec(shape, lambda i: (0, 0))
    return pl.pallas_call(
        _proj_residual_ln_kernel,
        out_shape=jax.ShapeDtypeStruct((M, dd), jnp.float32),
        grid=(M // tm,),
        in_specs=[row, row, const((dd, dd)),
                  const((1, dd)), const((1, dd)), const((1, dd))],
        out_specs=row,
        compiler_params=pltpu.CompilerParams(dimension_semantics=("parallel",)),
    )(x, o, w, b.reshape(1, dd), g.reshape(1, dd), beta.reshape(1, dd))


def _ffn_residual_ln_kernel(x_ref, w1_ref, b1_ref, w2_ref, b2_ref, g_ref, beta_ref, y_ref):
    x = x_ref[...]
    h1 = jnp.maximum(
        jnp.dot(x, w1_ref[...], preferred_element_type=jnp.float32) + b1_ref[...], 0.0)
    z = x + jnp.dot(h1, w2_ref[...], preferred_element_type=jnp.float32) + b2_ref[...]
    mu = jnp.mean(z, axis=-1, keepdims=True)
    var = jnp.mean(jnp.square(z - mu), axis=-1, keepdims=True)
    y_ref[...] = (z - mu) * jax.lax.rsqrt(var + EPS) * g_ref[...] + beta_ref[...]


def pallas_ffn_residual_ln(x, w1, b1, w2, b2, g, beta):
    M, dd = x.shape
    f = w1.shape[1]
    tm = _pick_tile(M, (512, 256, 128, 8))
    row = pl.BlockSpec((tm, dd), lambda i: (i, 0))
    const = lambda shape: pl.BlockSpec(shape, lambda i: (0, 0))
    return pl.pallas_call(
        _ffn_residual_ln_kernel,
        out_shape=jax.ShapeDtypeStruct((M, dd), jnp.float32),
        grid=(M // tm,),
        in_specs=[row, const((dd, f)), const((1, f)), const((f, dd)),
                  const((1, dd)), const((1, dd)), const((1, dd))],
        out_specs=row,
        compiler_params=pltpu.CompilerParams(dimension_semantics=("parallel",)),
    )(x, w1, b1.reshape(1, f), w2, b2.reshape(1, dd), g.reshape(1, dd), beta.reshape(1, dd))


# ----------------------------------------------------------------------------- forward pass
def relative_encoder_block(X, P, h):
    # TODO(synk): mask != None branch (masked_fill) not implemented; module exercised with mask=None.
    N, L, d = X.shape
    Xf = X.reshape(N * L, d)

    # fused q/k/v projection: one (N*L, d) x (d, 3d) MXU matmul instead of three
    Wqkv = jnp.concatenate([P["Wq"], P["We"], P["Wv"]], axis=1)
    QKV = pallas_matmul(Xf, Wqkv)                                   # (N*L, 3d)

    R = matrix_r_ex(L, d)
    Rq = pallas_matmul(R, P["Wr"])                                  # (2L-1, d)

    O = pallas_rel_attention(QKV, Rq, P["cb"], P["pb"], N=N, L=L, d=d, h=h)   # (N*L, d)

    Y = pallas_proj_residual_ln(Xf, O, P["Wo"], P["bo"], P["g1"], P["beta1"])
    Z = pallas_ffn_residual_ln(Y, P["W1"], P["b1"], P["W2"], P["b2"], P["g2"], P["beta2"])
    return Z.reshape(N, L, d)


forward = jax.jit(relative_encoder_block, static_argnums=(2,))


# ----------------------------------------------------------------------------- pure-JAX reference
def _ln(x, g, b):
    mu = jnp.mean(x, axis=-1, keepdims=True)
    var = jnp.mean(jnp.square(x - mu), axis=-1, keepdims=True)
    return (x - mu) / jnp.sqrt(var + EPS) * g + b


def _ref_shift_rows(M):
    # literal re-implementation of shift_rows for the L1 == L2 (self-attention) case
    N_, h_, L, _ = M.shape
    M1, M2 = M[..., :L], M[..., L - 1:]
    zero = jnp.zeros((N_, h_, L, 1), M.dtype)
    SM1 = jnp.tril(jnp.concatenate([zero, M1], -1).reshape(N_, h_, -1, L)[:, :, 1:, :], 1)
    SM2 = jnp.triu(jnp.concatenate([M2, zero], -1).reshape(N_, h_, -1, L)[:, :, :-1, :], 0)
    return SM1 + SM2


def ref_forward(X, P, h):
    N, L, d = X.shape
    H = d // h
    R = matrix_r_ex(L, d)
    q = (X @ P["Wq"]).reshape(N, L, h, H).transpose(0, 2, 1, 3)
    k = (X @ P["We"]).reshape(N, L, h, H).transpose(0, 2, 1, 3)
    v = (X @ P["Wv"]).reshape(N, L, h, H).transpose(0, 2, 1, 3)
    Q = (R @ P["Wr"]).reshape(1, 2 * L - 1, h, H).transpose(0, 2, 1, 3)
    pb = jnp.broadcast_to(P["pb"].reshape(1, h, 1, H), (N, h, L, H))
    cb = jnp.broadcast_to(P["cb"].reshape(1, h, 1, H), (N, h, L, H))
    QT = jnp.swapaxes(Q, -1, -2)
    kT = jnp.swapaxes(k, -1, -2)
    A = (jnp.matmul(q, kT) + _ref_shift_rows(jnp.matmul(q, QT))
         + jnp.matmul(cb, kT) + _ref_shift_rows(jnp.matmul(pb, QT)))
    p = jax.nn.softmax(A, axis=-1)
    O = jnp.matmul(p, v).transpose(0, 2, 1, 3).reshape(N, L, d)
    Y = _ln(X + (O @ P["Wo"] + P["bo"]), P["g1"], P["beta1"])
    ff = jnp.maximum(Y @ P["W1"] + P["b1"], 0.0) @ P["W2"] + P["b2"]
    return _ln(Y + ff, P["g2"], P["beta2"])


# ----------------------------------------------------------------------------- main
def make_params(key, d_model, d_ffn):
    def unif(k, shape, fan_in):
        bound = 1.0 / np.sqrt(fan_in)
        return jax.random.uniform(k, shape, jnp.float32, -bound, bound)

    ks = jax.random.split(key, 12)
    return {
        "Wq": unif(ks[0], (d_model, d_model), d_model),
        "We": unif(ks[1], (d_model, d_model), d_model),
        "Wv": unif(ks[2], (d_model, d_model), d_model),
        "Wr": unif(ks[3], (d_model, d_model), d_model),
        "cb": unif(ks[4], (d_model,), d_model),
        "pb": unif(ks[5], (d_model,), d_model),
        "Wo": unif(ks[6], (d_model, d_model), d_model),
        "bo": unif(ks[7], (d_model,), d_model),
        "g1": jnp.ones((d_model,), jnp.float32),
        "beta1": jnp.zeros((d_model,), jnp.float32),
        "W1": unif(ks[8], (d_model, d_ffn), d_model),
        "b1": unif(ks[9], (d_ffn,), d_model),
        "W2": unif(ks[10], (d_ffn, d_model), d_ffn),
        "b2": unif(ks[11], (d_model,), d_ffn),
        "g2": jnp.ones((d_model,), jnp.float32),
        "beta2": jnp.zeros((d_model,), jnp.float32),
    }


if __name__ == "__main__":
    h, d_model, d_ffn = 4, 32, 64
    N, L = 2, 8

    root = jax.random.PRNGKey(0)
    kparam, kx = jax.random.split(root)
    params = make_params(kparam, d_model, d_ffn)
    X = jax.random.normal(kx, (N, L, d_model), jnp.float32)

    out = forward(X, params, h)
    out = jax.block_until_ready(out)

    assert out.shape == (N, L, d_model)
    assert bool(jnp.all(jnp.isfinite(out)))

    ref = ref_forward(X, params, h)
    np.testing.assert_allclose(np.asarray(out), np.asarray(ref), rtol=5e-2, atol=5e-2)

    print("KERNEL_OK")
</pallas_src>

<mosaic_0001>
module attributes {stable_mosaic.version = 11 : i64} {
  func.func @_matmul_kernel(%arg0: i32, %arg1: i32, %arg2: i32, %arg3: memref<15x32xf32, #tpu.memory_space<vmem>>, %arg4: memref<32x32xf32, #tpu.memory_space<vmem>>, %arg5: memref<15x32xf32, #tpu.memory_space<vmem>>, %arg6: memref<15x32xf32, #tpu.memory_space<vmem>>) attributes {dimension_semantics = [#tpu.dimension_semantics<parallel>, #tpu.dimension_semantics<parallel>, #tpu.dimension_semantics<arbitrary>], iteration_bounds = array<i64: 1, 1, 1>, scalar_prefetch = 0 : i64, scratch_operands = 1 : i64, tpu.core_type = #tpu.core_type<tc>, window_params = [{transform_indices = @transform_0, window_bounds = array<i64: 15, 32>}, {transform_indices = @transform_1, window_bounds = array<i64: 32, 32>}, {transform_indices = @transform_2, window_bounds = array<i64: 15, 32>}]} {
    %c0_i32 = arith.constant 0 : i32
    %0 = arith.cmpi eq, %arg2, %c0_i32 : i32
    %1 = arith.extui %0 : i1 to i32
    %c0_i32_0 = arith.constant 0 : i32
    %2 = arith.cmpi ne, %1, %c0_i32_0 : i32
    scf.if %2 {
      %cst_10 = arith.constant 0.000000e+00 : f32
      %12 = vector.broadcast %cst_10 : f32 to vector<15x32xf32>
      %c0_11 = arith.constant 0 : index
      %c0_12 = arith.constant 0 : index
      %13 = vector.load %arg6[%c0_11, %c0_12] : memref<15x32xf32, #tpu.memory_space<vmem>>, vector<15x32xf32>
      tpu.vector_store %arg6[%c0_11, %c0_12], %12 {strides = array<i32>} : memref<15x32xf32, #tpu.memory_space<vmem>>, vector<15x32xf32>,
    } else {
    }
    %c0 = arith.constant 0 : index
    %c0_1 = arith.constant 0 : index
    %3 = vector.load %arg6[%c0, %c0_1] : memref<15x32xf32, #tpu.memory_space<vmem>>, vector<15x32xf32>
    %c0_2 = arith.constant 0 : index
    %c0_3 = arith.constant 0 : index
    %4 = vector.load %arg3[%c0_2, %c0_3] : memref<15x32xf32, #tpu.memory_space<vmem>>, vector<15x32xf32>
    %c0_4 = arith.constant 0 : index
    %c0_5 = arith.constant 0 : index
    %5 = vector.load %arg4[%c0_4, %c0_5] : memref<32x32xf32, #tpu.memory_space<vmem>>, vector<32x32xf32>
    %cst = arith.constant dense<0.000000e+00> : vector<15x32xf32>
    %6 = tpu.matmul %4, %5, %cst {dimension_numbers = #tpu.dot_dimension_numbers<[1], [0], [0], [1], [0, 0, 1, 1], [], []>} : vector<15x32xf32>, vector<32x32xf32>, vector<15x32xf32> -> vector<15x32xf32>
    %7 = arith.addf %3, %6 : vector<15x32xf32>
    %c0_6 = arith.constant 0 : index
    %c0_7 = arith.constant 0 : index
    %8 = vector.load %arg6[%c0_6, %c0_7] : memref<15x32xf32, #tpu.memory_space<vmem>>, vector<15x32xf32>
    tpu.vector_store %arg6[%c0_6, %c0_7], %7 {strides = array<i32>} : memref<15x32xf32, #tpu.memory_space<vmem>>, vector<15x32xf32>,
    %c0_i32_8 = arith.constant 0 : i32
    %9 = arith.cmpi eq, %arg2, %c0_i32_8 : i32
    %10 = arith.extui %9 : i1 to i32
    %c0_i32_9 = arith.constant 0 : i32
    %11 = arith.cmpi ne, %10, %c0_i32_9 : i32
    scf.if %11 {
      %c0_10 = arith.constant 0 : index
      %c0_11 = arith.constant 0 : index
      %12 = vector.load %arg6[%c0_10, %c0_11] : memref<15x32xf32, #tpu.memory_space<vmem>>, vector<15x32xf32>
      %c0_12 = arith.constant 0 : index
      %c0_13 = arith.constant 0 : index
      %13 = vector.load %arg5[%c0_12, %c0_13] : memref<15x32xf32, #tpu.memory_space<vmem>>, vector<15x32xf32>
      tpu.vector_store %arg5[%c0_12, %c0_13], %12 {strides = array<i32>} : memref<15x32xf32, #tpu.memory_space<vmem>>, vector<15x32xf32>,
    } else {
    }
    return
  }
  func.func @transform_0(%arg0: i32, %arg1: i32, %arg2: i32) -> (i32, i32) {
    %c0_i32 = arith.constant 0 : i32
    return %arg0, %arg2 : i32, i32
  }
  func.func @transform_1(%arg0: i32, %arg1: i32, %arg2: i32) -> (i32, i32) {
    %c0_i32 = arith.constant 0 : i32
    return %arg2, %arg1 : i32, i32
  }
  func.func @transform_2(%arg0: i32, %arg1: i32, %arg2: i32) -> (i32, i32) {
    %c0_i32 = arith.constant 0 : i32
    return %arg0, %arg1 : i32, i32
  }
}

module attributes {stable_mosaic.version = 11 : i64} {
  func.func @_matmul_kernel(%arg0: i32, %arg1: i32, %arg2: i32, %arg3: memref<8x32xf32, #tpu.memory_space<vmem>>, %arg4: memref<32x96xf32, #tpu.memory_space<vmem>>, %arg5: memref<8x96xf32, #tpu.memory_space<vmem>>, %arg6: memref<8x96xf32, #tpu.memory_space<vmem>>) attributes {dimension_semantics = [#tpu.dimension_semantics<parallel>, #tpu.dimension_semantics<parallel>, #tpu.dimension_semantics<arbitrary>], iteration_bounds = array<i64: 2, 1, 1>, scalar_prefetch = 0 : i64, scratch_operands = 1 : i64, tpu.core_type = #tpu.core_type<tc>, window_params = [{transform_indices = @transform_0, window_bounds = array<i64: 8, 32>}, {transform_indices = @transform_1, window_bounds = array<i64: 32, 96>}, {transform_indices = @transform_2, window_bounds = array<i64: 8, 96>}]} {
    %c0_i32 = arith.constant 0 : i32
    %0 = arith.cmpi eq, %arg2, %c0_i32 : i32
    %1 = arith.extui %0 : i1 to i32
    %c0_i32_0 = arith.constant 0 : i32
    %2 = arith.cmpi ne, %1, %c0_i32_0 : i32
    scf.if %2 {
      %cst_10 = arith.constant 0.000000e+00 : f32
      %12 = vector.broadcast %cst_10 : f32 to vector<8x96xf32>
      %c0_11 = arith.constant 0 : index
      %c0_12 = arith.constant 0 : index
      %13 = vector.load %arg6[%c0_11, %c0_12] : memref<8x96xf32, #tpu.memory_space<vmem>>, vector<8x96xf32>
      tpu.vector_store %arg6[%c0_11, %c0_12], %12 {strides = array<i32>} : memref<8x96xf32, #tpu.memory_space<vmem>>, vector<8x96xf32>,
    } else {
    }
    %c0 = arith.constant 0 : index
    %c0_1 = arith.constant 0 : index
    %3 = vector.load %arg6[%c0, %c0_1] : memref<8x96xf32, #tpu.memory_space<vmem>>, vector<8x96xf32>
    %c0_2 = arith.constant 0 : index
    %c0_3 = arith.constant 0 : index
    %4 = vector.load %arg3[%c0_2, %c0_3] : memref<8x32xf32, #tpu.memory_space<vmem>>, vector<8x32xf32>
    %c0_4 = arith.constant 0 : index
    %c0_5 = arith.constant 0 : index
    %5 = vector.load %arg4[%c0_4, %c0_5] : memref<32x96xf32, #tpu.memory_space<vmem>>, vector<32x96xf32>
    %cst = arith.constant dense<0.000000e+00> : vector<8x96xf32>
    %6 = tpu.matmul %4, %5, %cst {dimension_numbers = #tpu.dot_dimension_numbers<[1], [0], [0], [1], [0, 0, 1, 1], [], []>} : vector<8x32xf32>, vector<32x96xf32>, vector<8x96xf32> -> vector<8x96xf32>
    %7 = arith.addf %3, %6 : vector<8x96xf32>
    %c0_6 = arith.constant 0 : index
    %c0_7 = arith.constant 0 : index
    %8 = vector.load %arg6[%c0_6, %c0_7] : memref<8x96xf32, #tpu.memory_space<vmem>>, vector<8x96xf32>
    tpu.vector_store %arg6[%c0_6, %c0_7], %7 {strides = array<i32>} : memref<8x96xf32, #tpu.memory_space<vmem>>, vector<8x96xf32>,
    %c0_i32_8 = arith.constant 0 : i32
    %9 = arith.cmpi eq, %arg2, %c0_i32_8 : i32
    %10 = arith.extui %9 : i1 to i32
    %c0_i32_9 = arith.constant 0 : i32
    %11 = arith.cmpi ne, %10, %c0_i32_9 : i32
    scf.if %11 {
      %c0_10 = arith.constant 0 : index
      %c0_11 = arith.constant 0 : index
      %12 = vector.load %arg6[%c0_10, %c0_11] : memref<8x96xf32, #tpu.memory_space<vmem>>, vector<8x96xf32>
      %c0_12 = arith.constant 0 : index
      %c0_13 = arith.constant 0 : index
      %13 = vector.load %arg5[%c0_12, %c0_13] : memref<8x96xf32, #tpu.memory_space<vmem>>, vector<8x96xf32>
      tpu.vector_store %arg5[%c0_12, %c0_13], %12 {strides = array<i32>} : memref<8x96xf32, #tpu.memory_space<vmem>>, vector<8x96xf32>,
    } else {
    }
    return
  }
  func.func @transform_0(%arg0: i32, %arg1: i32, %arg2: i32) -> (i32, i32) {
    %c0_i32 = arith.constant 0 : i32
    return %arg0, %arg2 : i32, i32
  }
  func.func @transform_1(%arg0: i32, %arg1: i32, %arg2: i32) -> (i32, i32) {
    %c0_i32 = arith.constant 0 : i32
    return %arg2, %arg1 : i32, i32
  }
  func.func @transform_2(%arg0: i32, %arg1: i32, %arg2: i32) -> (i32, i32) {
    %c0_i32 = arith.constant 0 : i32
    return %arg0, %arg1 : i32, i32
  }
}

module attributes {stable_mosaic.version = 11 : i64} {
  func.func @_rel_attn_kernel(%arg0: i32, %arg1: memref<8x96xf32, #tpu.memory_space<vmem>>, %arg2: memref<15x32xf32, #tpu.memory_space<vmem>>, %arg3: memref<1x32xf32, #tpu.memory_space<vmem>>, %arg4: memref<1x32xf32, #tpu.memory_space<vmem>>, %arg5: memref<8x32xf32, #tpu.memory_space<vmem>>) attributes {dimension_semantics = [#tpu.dimension_semantics<parallel>], iteration_bounds = array<i64: 2>, scalar_prefetch = 0 : i64, scratch_operands = 0 : i64, tpu.core_type = #tpu.core_type<tc>, window_params = [{transform_indices = @transform_0, window_bounds = array<i64: 8, 96>}, {pipeline_mode = #tpu.pipeline_mode<synchronous>, transform_indices = @transform_1, window_bounds = array<i64: 15, 32>}, {pipeline_mode = #tpu.pipeline_mode<synchronous>, transform_indices = @transform_2, window_bounds = array<i64: 1, 32>}, {pipeline_mode = #tpu.pipeline_mode<synchronous>, transform_indices = @transform_3, window_bounds = array<i64: 1, 32>}, {transform_indices = @transform_4, window_bounds = array<i64: 8, 32>}]} {
    %c0 = arith.constant 0 : index
    %c0_0 = arith.constant 0 : index
    %0 = vector.load %arg1[%c0, %c0_0] : memref<8x96xf32, #tpu.memory_space<vmem>>, vector<8x96xf32>
    %c0_1 = arith.constant 0 : index
    %c0_2 = arith.constant 0 : index
    %1 = vector.load %arg2[%c0_1, %c0_2] : memref<15x32xf32, #tpu.memory_space<vmem>>, vector<15x32xf32>
    %c0_3 = arith.constant 0 : index
    %c0_4 = arith.constant 0 : index
    %2 = vector.load %arg3[%c0_3, %c0_4] : memref<1x32xf32, #tpu.memory_space<vmem>>, vector<1x32xf32>
    %c0_5 = arith.constant 0 : index
    %c0_6 = arith.constant 0 : index
    %3 = vector.load %arg4[%c0_5, %c0_6] : memref<1x32xf32, #tpu.memory_space<vmem>>, vector<1x32xf32>
    %4 = tpu.iota {dimensions = array<i32: 0>} : vector<8x8xi32>
    %5 = tpu.iota {dimensions = array<i32: 1>} : vector<8x8xi32>
    %6 = arith.cmpi eq, %4, %5 : vector<8x8xi32>
    %7 = arith.extui %6 : vector<8x8xi1> to vector<8x8xi32>
    %8 = arith.sitofp %7 : vector<8x8xi32> to vector<8x8xf32>
    %cst = arith.constant 1.000000e+00 : f32
    %9 = vector.broadcast %cst : f32 to vector<8x8xf32>
    %10 = arith.addf %9, %8 : vector<8x8xf32>
    %11 = vector.extract_strided_slice %0 {offsets = [0, 0], sizes = [8, 8], strides = [1, 1]} : vector<8x96xf32> to vector<8x8xf32>
    %12 = vector.extract_strided_slice %0 {offsets = [0, 32], sizes = [8, 8], strides = [1, 1]} : vector<8x96xf32> to vector<8x8xf32>
    %13 = vector.extract_strided_slice %0 {offsets = [0, 64], sizes = [8, 8], strides = [1, 1]} : vector<8x96xf32> to vector<8x8xf32>
    %14 = vector.extract_strided_slice %2 {offsets = [0, 0], sizes = [1, 8], strides = [1, 1]} : vector<1x32xf32> to vector<1x8xf32>
    %15 = vector.broadcast %14 : vector<1x8xf32> to vector<8x8xf32>
    %16 = arith.addf %11, %15 : vector<8x8xf32>
    %17 = vector.extract_strided_slice %3 {offsets = [0, 0], sizes = [1, 8], strides = [1, 1]} : vector<1x32xf32> to vector<1x8xf32>
    %18 = vector.broadcast %17 : vector<1x8xf32> to vector<8x8xf32>
    %19 = arith.addf %11, %18 : vector<8x8xf32>
    %cst_7 = arith.constant dense<0.000000e+00> : vector<8x8xf32>
    %20 = tpu.matmul %16, %12, %cst_7 {dimension_numbers = #tpu.dot_dimension_numbers<[1], [1], [0], [0], [0, 0, 1, 0], [], []>} : vector<8x8xf32>, vector<8x8xf32>, vector<8x8xf32> -> vector<8x8xf32>
    %21 = vector.extract_strided_slice %1 {offsets = [0, 0], sizes = [15, 8], strides = [1, 1]} : vector<15x32xf32> to vector<15x8xf32>
    %cst_8 = arith.constant dense<0.000000e+00> : vector<8x15xf32>
    %22 = tpu.matmul %19, %21, %cst_8 {dimension_numbers = #tpu.dot_dimension_numbers<[1], [1], [0], [0], [0, 0, 1, 0], [], []>} : vector<8x8xf32>, vector<15x8xf32>, vector<8x15xf32> -> vector<8x15xf32>
    %23 = vector.extract_strided_slice %22 {offsets = [0, 7], sizes = [1, 8], strides = [1, 1]} : vector<8x15xf32> to vector<1x8xf32>
    %24 = vector.extract_strided_slice %22 {offsets = [1, 6], sizes = [1, 8], strides = [1, 1]} : vector<8x15xf32> to vector<1x8xf32>
    %25 = vector.extract_strided_slice %22 {offsets = [2, 5], sizes = [1, 8], strides = [1, 1]} : vector<8x15xf32> to vector<1x8xf32>
    %26 = vector.extract_strided_slice %22 {offsets = [3, 4], sizes = [1, 8], strides = [1, 1]} : vector<8x15xf32> to vector<1x8xf32>
    %27 = vector.extract_strided_slice %22 {offsets = [4, 3], sizes = [1, 8], strides = [1, 1]} : vector<8x15xf32> to vector<1x8xf32>
    %28 = vector.extract_strided_slice %22 {offsets = [5, 2], sizes = [1, 8], strides = [1, 1]} : vector<8x15xf32> to vector<1x8xf32>
    %29 = vector.extract_strided_slice %22 {offsets = [6, 1], sizes = [1, 8], strides = [1, 1]} : vector<8x15xf32> to vector<1x8xf32>
    %30 = vector.extract_strided_slice %22 {offsets = [7, 0], sizes = [1, 8], strides = [1, 1]} : vector<8x15xf32> to vector<1x8xf32>
    %31 = tpu.concatenate %23, %24, %25, %26, %27, %28, %29, %30 in 0 : vector<1x8xf32>, vector<1x8xf32>, vector<1x8xf32>, vector<1x8xf32>, vector<1x8xf32>, vector<1x8xf32>, vector<1x8xf32>, vector<1x8xf32> -> vector<8x8xf32>
    %32 = arith.mulf %10, %31 : vector<8x8xf32>
    %33 = arith.addf %20, %32 : vector<8x8xf32>
    %cst_9 = arith.constant dense<0xFF800000> : vector<8xf32>
    %34 = vector.multi_reduction <maximumf>, %33, %cst_9 [1] : vector<8x8xf32> to vector<8xf32>
    %35 = vector.shape_cast %34 : vector<8xf32> to vector<8x1xf32>
    %36 = vector.broadcast %35 : vector<8x1xf32> to vector<8x8xf32>
    %37 = arith.subf %33, %36 : vector<8x8xf32>
    %38 = math.exp %37 : vector<8x8xf32>
    %cst_10 = arith.constant dense<0.000000e+00> : vector<8xf32>
    %39 = vector.multi_reduction <add>, %38, %cst_10 [1] : vector<8x8xf32> to vector<8xf32>
    %40 = vector.shape_cast %39 : vector<8xf32> to vector<8x1xf32>
    %41 = tpu.reciprocal %40 {approx = true} : vector<8x1xf32> -> vector<8x1xf32>
    %42 = vector.broadcast %41 : vector<8x1xf32> to vector<8x8xf32>
    %43 = arith.mulf %38, %42 : vector<8x8xf32>
    %cst_11 = arith.constant dense<0.000000e+00> : vector<8x8xf32>
    %44 = tpu.matmul %43, %13, %cst_11 {dimension_numbers = #tpu.dot_dimension_numbers<[1], [0], [0], [1], [0, 0, 1, 1], [], []>} : vector<8x8xf32>, vector<8x8xf32>, vector<8x8xf32> -> vector<8x8xf32>
    %45 = vector.extract_strided_slice %0 {offsets = [0, 8], sizes = [8, 8], strides = [1, 1]} : vector<8x96xf32> to vector<8x8xf32>
    %46 = vector.extract_strided_slice %0 {offsets = [0, 40], sizes = [8, 8], strides = [1, 1]} : vector<8x96xf32> to vector<8x8xf32>
    %47 = vector.extract_strided_slice %0 {offsets = [0, 72], sizes = [8, 8], strides = [1, 1]} : vector<8x96xf32> to vector<8x8xf32>
    %48 = vector.extract_strided_slice %2 {offsets = [0, 8], sizes = [1, 8], strides = [1, 1]} : vector<1x32xf32> to vector<1x8xf32>
    %49 = vector.broadcast %48 : vector<1x8xf32> to vector<8x8xf32>
    %50 = arith.addf %45, %49 : vector<8x8xf32>
    %51 = vector.extract_strided_slice %3 {offsets = [0, 8], sizes = [1, 8], strides = [1, 1]} : vector<1x32xf32> to vector<1x8xf32>
    %52 = vector.broadcast %51 : vector<1x8xf32> to vector<8x8xf32>
    %53 = arith.addf %45, %52 : vector<8x8xf32>
    %cst_12 = arith.constant dense<0.000000e+00> : vector<8x8xf32>
    %54 = tpu.matmul %50, %46, %cst_12 {dimension_numbers = #tpu.dot_dimension_numbers<[1], [1], [0], [0], [0, 0, 1, 0], [], []>} : vector<8x8xf32>, vector<8x8xf32>, vector<8x8xf32> -> vector<8x8xf32>
    %55 = vector.extract_strided_slice %1 {offsets = [0, 8], sizes = [15, 8], strides = [1, 1]} : vector<15x32xf32> to vector<15x8xf32>
    %cst_13 = arith.constant dense<0.000000e+00> : vector<8x15xf32>
    %56 = tpu.matmul %53, %55, %cst_13 {dimension_numbers = #tpu.dot_dimension_numbers<[1], [1], [0], [0], [0, 0, 1, 0], [], []>} : vector<8x8xf32>, vector<15x8xf32>, vector<8x15xf32> -> vector<8x15xf32>
    %57 = vector.extract_strided_slice %56 {offsets = [0, 7], sizes = [1, 8], strides = [1, 1]} : vector<8x15xf32> to vector<1x8xf32>
    %58 = vector.extract_strided_slice %56 {offsets = [1, 6], sizes = [1, 8], strides = [1, 1]} : vector<8x15xf32> to vector<1x8xf32>
    %59 = vector.extract_strided_slice %56 {offsets = [2, 5], sizes = [1, 8], strides = [1, 1]} : vector<8x15xf32> to vector<1x8xf32>
    %60 = vector.extract_strided_slice %56 {offsets = [3, 4], sizes = [1, 8], strides = [1, 1]} : vector<8x15xf32> to vector<1x8xf32>
    %61 = vector.extract_strided_slice %56 {offsets = [4, 3], sizes = [1, 8], strides = [1, 1]} : vector<8x15xf32> to vector<1x8xf32>
    %62 = vector.extract_strided_slice %56 {offsets = [5, 2], sizes = [1, 8], strides = [1, 1]} : vector<8x15xf32> to vector<1x8xf32>
    %63 = vector.extract_strided_slice %56 {offsets = [6, 1], sizes = [1, 8], strides = [1, 1]} : vector<8x15xf32> to vector<1x8xf32>
    %64 = vector.extract_strided_slice %56 {offsets = [7, 0], sizes = [1, 8], strides = [1, 1]} : vector<8x15xf32> to vector<1x8xf32>
    %65 = tpu.concatenate %57, %58, %59, %60, %61, %62, %63, %64 in 0 : vector<1x8xf32>, vector<1x8xf32>, vector<1x8xf32>, vector<1x8xf32>, vector<1x8xf32>, vector<1x8xf32>, vector<1x8xf32>, vector<1x8xf32> -> vector<8x8xf32>
    %66 = arith.mulf %10, %65 : vector<8x8xf32>
    %67 = arith.addf %54, %66 : vector<8x8xf32>
    %cst_14 = arith.constant dense<0xFF800000> : vector<8xf32>
    %68 = vector.multi_reduction <maximumf>, %67, %cst_14 [1] : vector<8x8xf32> to vector<8xf32>
    %69 = vector.shape_cast %68 : vector<8xf32> to vector<8x1xf32>
    %70 = vector.broadcast %69 : vector<8x1xf32> to vector<8x8xf32>
    %71 = arith.subf %67, %70 : vector<8x8xf32>
    %72 = math.exp %71 : vector<8x8xf32>
    %cst_15 = arith.constant dense<0.000000e+00> : vector<8xf32>
    %73 = vector.multi_reduction <add>, %72, %cst_15 [1] : vector<8x8xf32> to vector<8xf32>
    %74 = vector.shape_cast %73 : vector<8xf32> to vector<8x1xf32>
    %75 = tpu.reciprocal %74 {approx = true} : vector<8x1xf32> -> vector<8x1xf32>
    %76 = vector.broadcast %75 : vector<8x1xf32> to vector<8x8xf32>
    %77 = arith.mulf %72, %76 : vector<8x8xf32>
    %cst_16 = arith.constant dense<0.000000e+00> : vector<8x8xf32>
    %78 = tpu.matmul %77, %47, %cst_16 {dimension_numbers = #tpu.dot_dimension_numbers<[1], [0], [0], [1], [0, 0, 1, 1], [], []>} : vector<8x8xf32>, vector<8x8xf32>, vector<8x8xf32> -> vector<8x8xf32>
    %79 = vector.extract_strided_slice %0 {offsets = [0, 16], sizes = [8, 8], strides = [1, 1]} : vector<8x96xf32> to vector<8x8xf32>
    %80 = vector.extract_strided_slice %0 {offsets = [0, 48], sizes = [8, 8], strides = [1, 1]} : vector<8x96xf32> to vector<8x8xf32>
    %81 = vector.extract_strided_slice %0 {offsets = [0, 80], sizes = [8, 8], strides = [1, 1]} : vector<8x96xf32> to vector<8x8xf32>
    %82 = vector.extract_strided_slice %2 {offsets = [0, 16], sizes = [1, 8], strides = [1, 1]} : vector<1x32xf32> to vector<1x8xf32>
    %83 = vector.broadcast %82 : vector<1x8xf32> to vector<8x8xf32>
    %84 = arith.addf %79, %83 : vector<8x8xf32>
    %85 = vector.extract_strided_slice %3 {offsets = [0, 16], sizes = [1, 8], strides = [1, 1]} : vector<1x32xf32> to vector<1x8xf32>
    %86 = vector.broadcast %85 : vector<1x8xf32> to vector<8x8xf32>
    %87 = arith.addf %79, %86 : vector<8x8xf32>
    %cst_17 = arith.constant dense<0.000000e+00> : vector<8x8xf32>
    %88 = tpu.matmul %84, %80, %cst_17 {dimension_numbers = #tpu.dot_dimension_numbers<[1], [1], [0], [0], [0, 0, 1, 0], [], []>} : vector<8x8xf32>, vector<8x8xf32>, vector<8x8xf32> -> vector<8x8xf32>
    %89 = vector.extract_strided_slice %1 {offsets = [0, 16], sizes = [15, 8], strides = [1, 1]} : vector<15x32xf32> to vector<15x8xf32>
    %cst_18 = arith.constant dense<0.000000e+00> : vector<8x15xf32>
    %90 = tpu.matmul %87, %89, %cst_18 {dimension_numbers = #tpu.dot_dimension_numbers<[1], [1], [0], [0], [0, 0, 1, 0], [], []>} : vector<8x8xf32>, vector<15x8xf32>, vector<8x15xf32> -> vector<8x15xf32>
    %91 = vector.extract_strided_slice %90 {offsets = [0, 7], sizes = [1, 8], strides = [1, 1]} : vector<8x15xf32> to vector<1x8xf32>
    %92 = vector.extract_strided_slice %90 {offsets = [1, 6], sizes = [1, 8], strides = [1, 1]} : vector<8x15xf32> to vector<1x8xf32>
    %93 = vector.extract_strided_slice %90 {offsets = [2, 5], sizes = [1, 8], strides = [1, 1]} : vector<8x15xf32> to vector<1x8xf32>
    %94 = vector.extract_strided_slice %90 {offsets = [3, 4], sizes = [1, 8], strides = [1, 1]} : vector<8x15xf32> to vector<1x8xf32>
    %95 = vector.extract_strided_slice %90 {offsets = [4, 3], sizes = [1, 8], strides = [1, 1]} : vector<8x15xf32> to vector<1x8xf32>
    %96 = vector.extract_strided_slice %90 {offsets = [5, 2], sizes = [1, 8], strides = [1, 1]} : vector<8x15xf32> to vector<1x8xf32>
    %97 = vector.extract_strided_slice %90 {offsets = [6, 1], sizes = [1, 8], strides = [1, 1]} : vector<8x15xf32> to vector<1x8xf32>
    %98 = vector.extract_strided_slice %90 {offsets = [7, 0], sizes = [1, 8], strides = [1, 1]} : vector<8x15xf32> to vector<1x8xf32>
    %99 = tpu.concatenate %91, %92, %93, %94, %95, %96, %97, %98 in 0 : vector<1x8xf32>, vector<1x8xf32>, vector<1x8xf32>, vector<1x8xf32>, vector<1x8xf32>, vector<1x8xf32>, vector<1x8xf32>, vector<1x8xf32> -> vector<8x8xf32>
    %100 = arith.mulf %10, %99 : vector<8x8xf32>
    %101 = arith.addf %88, %100 : vector<8x8xf32>
    %cst_19 = arith.constant dense<0xFF800000> : vector<8xf32>
    %102 = vector.multi_reduction <maximumf>, %101, %cst_19 [1] : vector<8x8xf32> to vector<8xf32>
    %103 = vector.shape_cast %102 : vector<8xf32> to vector<8x1xf32>
    %104 = vector.broadcast %103 : vector<8x1xf32> to vector<8x8xf32>
    %105 = arith.subf %101, %104 : vector<8x8xf32>
    %106 = math.exp %105 : vector<8x8xf32>
    %cst_20 = arith.constant dense<0.000000e+00> : vector<8xf32>
    %107 = vector.multi_reduction <add>, %106, %cst_20 [1] : vector<8x8xf32> to vector<8xf32>
    %108 = vector.shape_cast %107 : vector<8xf32> to vector<8x1xf32>
    %109 = tpu.reciprocal %108 {approx = true} : vector<8x1xf32> -> vector<8x1xf32>
    %110 = vector.broadcast %109 : vector<8x1xf32> to vector<8x8xf32>
    %111 = arith.mulf %106, %110 : vector<8x8xf32>
    %cst_21 = arith.constant dense<0.000000e+00> : vector<8x8xf32>
    %112 = tpu.matmul %111, %81, %cst_21 {dimension_numbers = #tpu.dot_dimension_numbers<[1], [0], [0], [1], [0, 0, 1, 1], [], []>} : vector<8x8xf32>, vector<8x8xf32>, vector<8x8xf32> -> vector<8x8xf32>
    %113 = vector.extract_strided_slice %0 {offsets = [0, 24], sizes = [8, 8], strides = [1, 1]} : vector<8x96xf32> to vector<8x8xf32>
    %114 = vector.extract_strided_slice %0 {offsets = [0, 56], sizes = [8, 8], strides = [1, 1]} : vector<8x96xf32> to vector<8x8xf32>
    %115 = vector.extract_strided_slice %0 {offsets = [0, 88], sizes = [8, 8], strides = [1, 1]} : vector<8x96xf32> to vector<8x8xf32>
    %116 = vector.extract_strided_slice %2 {offsets = [0, 24], sizes = [1, 8], strides = [1, 1]} : vector<1x32xf32> to vector<1x8xf32>
    %117 = vector.broadcast %116 : vector<1x8xf32> to vector<8x8xf32>
    %118 = arith.addf %113, %117 : vector<8x8xf32>
    %119 = vector.extract_strided_slice %3 {offsets = [0, 24], sizes = [1, 8], strides = [1, 1]} : vector<1x32xf32> to vector<1x8xf32>
    %120 = vector.broadcast %119 : vector<1x8xf32> to vector<8x8xf32>
    %121 = arith.addf %113, %120 : vector<8x8xf32>
    %cst_22 = arith.constant dense<0.000000e+00> : vector<8x8xf32>
    %122 = tpu.matmul %118, %114, %cst_22 {dimension_numbers = #tpu.dot_dimension_numbers<[1], [1], [0], [0], [0, 0, 1, 0], [], []>} : vector<8x8xf32>, vector<8x8xf32>, vector<8x8xf32> -> vector<8x8xf32>
    %123 = vector.extract_strided_slice %1 {offsets = [0, 24], sizes = [15, 8], strides = [1, 1]} : vector<15x32xf32> to vector<15x8xf32>
    %cst_23 = arith.constant dense<0.000000e+00> : vector<8x15xf32>
    %124 = tpu.matmul %121, %123, %cst_23 {dimension_numbers = #tpu.dot_dimension_numbers<[1], [1], [0], [0], [0, 0, 1, 0], [], []>} : vector<8x8xf32>, vector<15x8xf32>, vector<8x15xf32> -> vector<8x15xf32>
    %125 = vector.extract_strided_slice %124 {offsets = [0, 7], sizes = [1, 8], strides = [1, 1]} : vector<8x15xf32> to vector<1x8xf32>
    %126 = vector.extract_strided_slice %124 {offsets = [1, 6], sizes = [1, 8], strides = [1, 1]} : vector<8x15xf32> to vector<1x8xf32>
    %127 = vector.extract_strided_slice %124 {offsets = [2, 5], sizes = [1, 8], strides = [1, 1]} : vector<8x15xf32> to vector<1x8xf32>
    %128 = vector.extract_strided_slice %124 {offsets = [3, 4], sizes = [1, 8], strides = [1, 1]} : vector<8x15xf32> to vector<1x8xf32>
    %129 = vector.extract_strided_slice %124 {offsets = [4, 3], sizes = [1, 8], strides = [1, 1]} : vector<8x15xf32> to vector<1x8xf32>
    %130 = vector.extract_strided_slice %124 {offsets = [5, 2], sizes = [1, 8], strides = [1, 1]} : vector<8x15xf32> to vector<1x8xf32>
    %131 = vector.extract_strided_slice %124 {offsets = [6, 1], sizes = [1, 8], strides = [1, 1]} : vector<8x15xf32> to vector<1x8xf32>
    %132 = vector.extract_strided_slice %124 {offsets = [7, 0], sizes = [1, 8], strides = [1, 1]} : vector<8x15xf32> to vector<1x8xf32>
    %133 = tpu.concatenate %125, %126, %127, %128, %129, %130, %131, %132 in 0 : vector<1x8xf32>, vector<1x8xf32>, vector<1x8xf32>, vector<1x8xf32>, vector<1x8xf32>, vector<1x8xf32>, vector<1x8xf32>, vector<1x8xf32> -> vector<8x8xf32>
    %134 = arith.mulf %10, %133 : vector<8x8xf32>
    %135 = arith.addf %122, %134 : vector<8x8xf32>
    %cst_24 = arith.constant dense<0xFF800000> : vector<8xf32>
    %136 = vector.multi_reduction <maximumf>, %135, %cst_24 [1] : vector<8x8xf32> to vector<8xf32>
    %137 = vector.shape_cast %136 : vector<8xf32> to vector<8x1xf32>
    %138 = vector.broadcast %137 : vector<8x1xf32> to vector<8x8xf32>
    %139 = arith.subf %135, %138 : vector<8x8xf32>
    %140 = math.exp %139 : vector<8x8xf32>
    %cst_25 = arith.constant dense<0.000000e+00> : vector<8xf32>
    %141 = vector.multi_reduction <add>, %140, %cst_25 [1] : vector<8x8xf32> to vector<8xf32>
    %142 = vector.shape_cast %141 : vector<8xf32> to vector<8x1xf32>
    %143 = tpu.reciprocal %142 {approx = true} : vector<8x1xf32> -> vector<8x1xf32>
    %144 = vector.broadcast %143 : vector<8x1xf32> to vector<8x8xf32>
    %145 = arith.mulf %140, %144 : vector<8x8xf32>
    %cst_26 = arith.constant dense<0.000000e+00> : vector<8x8xf32>
    %146 = tpu.matmul %145, %115, %cst_26 {dimension_numbers = #tpu.dot_dimension_numbers<[1], [0], [0], [1], [0, 0, 1, 1], [], []>} : vector<8x8xf32>, vector<8x8xf32>, vector<8x8xf32> -> vector<8x8xf32>
    %147 = tpu.concatenate %44, %78, %112, %146 in 1 : vector<8x8xf32>, vector<8x8xf32>, vector<8x8xf32>, vector<8x8xf32> -> vector<8x32xf32>
    %c0_27 = arith.constant 0 : index
    %c0_28 = arith.constant 0 : index
    %148 = vector.load %arg5[%c0_27, %c0_28] : memref<8x32xf32, #tpu.memory_space<vmem>>, vector<8x32xf32>
    tpu.vector_store %arg5[%c0_27, %c0_28], %147 {strides = array<i32>} : memref<8x32xf32, #tpu.memory_space<vmem>>, vector<8x32xf32>,
    return
  }
  func.func @transform_0(%arg0: i32) -> (i32, i32) {
    %c0_i32 = arith.constant 0 : i32
    %c0_i32_0 = arith.constant 0 : i32
    return %arg0, %c0_i32 : i32, i32
  }
  func.func @transform_1(%arg0: i32) -> (i32, i32) {
    %c0_i32 = arith.constant 0 : i32
    %c0_i32_0 = arith.constant 0 : i32
    %c0_i32_1 = arith.constant 0 : i32
    return %c0_i32, %c0_i32_0 : i32, i32
  }
  func.func @transform_2(%arg0: i32) -> (i32, i32) {
    %c0_i32 = arith.constant 0 : i32
    %c0_i32_0 = arith.constant 0 : i32
    %c0_i32_1 = arith.constant 0 : i32
    return %c0_i32, %c0_i32_0 : i32, i32
  }
  func.func @transform_3(%arg0: i32) -> (i32, i32) {
    %c0_i32 = arith.constant 0 : i32
    %c0_i32_0 = arith.constant 0 : i32
    %c0_i32_1 = arith.constant 0 : i32
    return %c0_i32, %c0_i32_0 : i32, i32
  }
  func.func @transform_4(%arg0: i32) -> (i32, i32) {
    %c0_i32 = arith.constant 0 : i32
    %c0_i32_0 = arith.constant 0 : i32
    return %arg0, %c0_i32 : i32, i32
  }
}

module attributes {stable_mosaic.version = 11 : i64} {
  func.func @_proj_residual_ln_kernel(%arg0: i32, %arg1: memref<8x32xf32, #tpu.memory_space<vmem>>, %arg2: memref<8x32xf32, #tpu.memory_space<vmem>>, %arg3: memref<32x32xf32, #tpu.memory_space<vmem>>, %arg4: memref<1x32xf32, #tpu.memory_space<vmem>>, %arg5: memref<1x32xf32, #tpu.memory_space<vmem>>, %arg6: memref<1x32xf32, #tpu.memory_space<vmem>>, %arg7: memref<8x32xf32, #tpu.memory_space<vmem>>) attributes {dimension_semantics = [#tpu.dimension_semantics<parallel>], iteration_bounds = array<i64: 2>, scalar_prefetch = 0 : i64, scratch_operands = 0 : i64, tpu.core_type = #tpu.core_type<tc>, window_params = [{transform_indices = @transform_0, window_bounds = array<i64: 8, 32>}, {transform_indices = @transform_1, window_bounds = array<i64: 8, 32>}, {pipeline_mode = #tpu.pipeline_mode<synchronous>, transform_indices = @transform_2, window_bounds = array<i64: 32, 32>}, {pipeline_mode = #tpu.pipeline_mode<synchronous>, transform_indices = @transform_3, window_bounds = array<i64: 1, 32>}, {pipeline_mode = #tpu.pipeline_mode<synchronous>, transform_indices = @transform_4, window_bounds = array<i64: 1, 32>}, {pipeline_mode = #tpu.pipeline_mode<synchronous>, transform_indices = @transform_5, window_bounds = array<i64: 1, 32>}, {transform_indices = @transform_6, window_bounds = array<i64: 8, 32>}]} {
    %c0 = arith.constant 0 : index
    %c0_0 = arith.constant 0 : index
    %0 = vector.load %arg1[%c0, %c0_0] : memref<8x32xf32, #tpu.memory_space<vmem>>, vector<8x32xf32>
    %c0_1 = arith.constant 0 : index
    %c0_2 = arith.constant 0 : index
    %1 = vector.load %arg2[%c0_1, %c0_2] : memref<8x32xf32, #tpu.memory_space<vmem>>, vector<8x32xf32>
    %c0_3 = arith.constant 0 : index
    %c0_4 = arith.constant 0 : index
    %2 = vector.load %arg3[%c0_3, %c0_4] : memref<32x32xf32, #tpu.memory_space<vmem>>, vector<32x32xf32>
    %cst = arith.constant dense<0.000000e+00> : vector<8x32xf32>
    %3 = tpu.matmul %1, %2, %cst {dimension_numbers = #tpu.dot_dimension_numbers<[1], [0], [0], [1], [0, 0, 1, 1], [], []>} : vector<8x32xf32>, vector<32x32xf32>, vector<8x32xf32> -> vector<8x32xf32>
    %4 = arith.addf %0, %3 : vector<8x32xf32>
    %c0_5 = arith.constant 0 : index
    %c0_6 = arith.constant 0 : index
    %5 = vector.load %arg4[%c0_5, %c0_6] : memref<1x32xf32, #tpu.memory_space<vmem>>, vector<1x32xf32>
    %6 = vector.broadcast %5 : vector<1x32xf32> to vector<8x32xf32>
    %7 = arith.addf %4, %6 : vector<8x32xf32>
    %cst_7 = arith.constant dense<0.000000e+00> : vector<8xf32>
    %8 = vector.multi_reduction <add>, %7, %cst_7 [1] : vector<8x32xf32> to vector<8xf32>
    %9 = vector.shape_cast %8 : vector<8xf32> to vector<8x1xf32>
    %cst_8 = arith.constant 3.200000e+01 : f32
    %10 = vector.broadcast %cst_8 : f32 to vector<8x1xf32>
    %11 = arith.divf %9, %10 : vector<8x1xf32>
    %12 = vector.broadcast %11 : vector<8x1xf32> to vector<8x32xf32>
    %13 = arith.subf %7, %12 : vector<8x32xf32>
    %14 = arith.mulf %13, %13 : vector<8x32xf32>
    %cst_9 = arith.constant dense<0.000000e+00> : vector<8xf32>
    %15 = vector.multi_reduction <add>, %14, %cst_9 [1] : vector<8x32xf32> to vector<8xf32>
    %16 = vector.shape_cast %15 : vector<8xf32> to vector<8x1xf32>
    %cst_10 = arith.constant 3.200000e+01 : f32
    %17 = vector.broadcast %cst_10 : f32 to vector<8x1xf32>
    %18 = arith.divf %16, %17 : vector<8x1xf32>
    %19 = vector.broadcast %11 : vector<8x1xf32> to vector<8x32xf32>
    %20 = arith.subf %7, %19 : vector<8x32xf32>
    %cst_11 = arith.constant 9.99999974E-6 : f32
    %21 = vector.broadcast %cst_11 : f32 to vector<8x1xf32>
    %22 = arith.addf %18, %21 : vector<8x1xf32>
    %23 = math.rsqrt %22 : vector<8x1xf32>
    %24 = vector.broadcast %23 : vector<8x1xf32> to vector<8x32xf32>
    %25 = arith.mulf %20, %24 : vector<8x32xf32>
    %c0_12 = arith.constant 0 : index
    %c0_13 = arith.constant 0 : index
    %26 = vector.load %arg5[%c0_12, %c0_13] : memref<1x32xf32, #tpu.memory_space<vmem>>, vector<1x32xf32>
    %27 = vector.broadcast %26 : vector<1x32xf32> to vector<8x32xf32>
    %28 = arith.mulf %25, %27 : vector<8x32xf32>
    %c0_14 = arith.constant 0 : index
    %c0_15 = arith.constant 0 : index
    %29 = vector.load %arg6[%c0_14, %c0_15] : memref<1x32xf32, #tpu.memory_space<vmem>>, vector<1x32xf32>
    %30 = vector.broadcast %29 : vector<1x32xf32> to vector<8x32xf32>
    %31 = arith.addf %28, %30 : vector<8x32xf32>
    %c0_16 = arith.constant 0 : index
    %c0_17 = arith.constant 0 : index
    %32 = vector.load %arg7[%c0_16, %c0_17] : memref<8x32xf32, #tpu.memory_space<vmem>>, vector<8x32xf32>
    tpu.vector_store %arg7[%c0_16, %c0_17], %31 {strides = array<i32>} : memref<8x32xf32, #tpu.memory_space<vmem>>, vector<8x32xf32>,
    return
  }
  func.func @transform_0(%arg0: i32) -> (i32, i32) {
    %c0_i32 = arith.constant 0 : i32
    %c0_i32_0 = arith.constant 0 : i32
    return %arg0, %c0_i32 : i32, i32
  }
  func.func @transform_1(%arg0: i32) -> (i32, i32) {
    %c0_i32 = arith.constant 0 : i32
    %c0_i32_0 = arith.constant 0 : i32
    return %arg0, %c0_i32 : i32, i32
  }
  func.func @transform_2(%arg0: i32) -> (i32, i32) {
    %c0_i32 = arith.constant 0 : i32
    %c0_i32_0 = arith.constant 0 : i32
    %c0_i32_1 = arith.constant 0 : i32
    return %c0_i32, %c0_i32_0 : i32, i32
  }
  func.func @transform_3(%arg0: i32) -> (i32, i32) {
    %c0_i32 = arith.constant 0 : i32
    %c0_i32_0 = arith.constant 0 : i32
    %c0_i32_1 = arith.constant 0 : i32
    return %c0_i32, %c0_i32_0 : i32, i32
  }
  func.func @transform_4(%arg0: i32) -> (i32, i32) {
    %c0_i32 = arith.constant 0 : i32
    %c0_i32_0 = arith.constant 0 : i32
    %c0_i32_1 = arith.constant 0 : i32
    return %c0_i32, %c0_i32_0 : i32, i32
  }
  func.func @transform_5(%arg0: i32) -> (i32, i32) {
    %c0_i32 = arith.constant 0 : i32
    %c0_i32_0 = arith.constant 0 : i32
    %c0_i32_1 = arith.constant 0 : i32
    return %c0_i32, %c0_i32_0 : i32, i32
  }
  func.func @transform_6(%arg0: i32) -> (i32, i32) {
    %c0_i32 = arith.constant 0 : i32
    %c0_i32_0 = arith.constant 0 : i32
    return %arg0, %c0_i32 : i32, i32
  }
}

module attributes {stable_mosaic.version = 11 : i64} {
  func.func @_ffn_residual_ln_kernel(%arg0: i32, %arg1: memref<8x32xf32, #tpu.memory_space<vmem>>, %arg2: memref<32x64xf32, #tpu.memory_space<vmem>>, %arg3: memref<1x64xf32, #tpu.memory_space<vmem>>, %arg4: memref<64x32xf32, #tpu.memory_space<vmem>>, %arg5: memref<1x32xf32, #tpu.memory_space<vmem>>, %arg6: memref<1x32xf32, #tpu.memory_space<vmem>>, %arg7: memref<1x32xf32, #tpu.memory_space<vmem>>, %arg8: memref<8x32xf32, #tpu.memory_space<vmem>>) attributes {dimension_semantics = [#tpu.dimension_semantics<parallel>], iteration_bounds = array<i64: 2>, scalar_prefetch = 0 : i64, scratch_operands = 0 : i64, tpu.core_type = #tpu.core_type<tc>, window_params = [{transform_indices = @transform_0, window_bounds = array<i64: 8, 32>}, {pipeline_mode = #tpu.pipeline_mode<synchronous>, transform_indices = @transform_1, window_bounds = array<i64: 32, 64>}, {pipeline_mode = #tpu.pipeline_mode<synchronous>, transform_indices = @transform_2, window_bounds = array<i64: 1, 64>}, {pipeline_mode = #tpu.pipeline_mode<synchronous>, transform_indices = @transform_3, window_bounds = array<i64: 64, 32>}, {pipeline_mode = #tpu.pipeline_mode<synchronous>, transform_indices = @transform_4, window_bounds = array<i64: 1, 32>}, {pipeline_mode = #tpu.pipeline_mode<synchronous>, transform_indices = @transform_5, window_bounds = array<i64: 1, 32>}, {pipeline_mode = #tpu.pipeline_mode<synchronous>, transform_indices = @transform_6, window_bounds = array<i64: 1, 32>}, {transform_indices = @transform_7, window_bounds = array<i64: 8, 32>}]} {
    %c0 = arith.constant 0 : index
    %c0_0 = arith.constant 0 : index
    %0 = vector.load %arg1[%c0, %c0_0] : memref<8x32xf32, #tpu.memory_space<vmem>>, vector<8x32xf32>
    %c0_1 = arith.constant 0 : index
    %c0_2 = arith.constant 0 : index
    %1 = vector.load %arg2[%c0_1, %c0_2] : memref<32x64xf32, #tpu.memory_space<vmem>>, vector<32x64xf32>
    %cst = arith.constant dense<0.000000e+00> : vector<8x64xf32>
    %2 = tpu.matmul %0, %1, %cst {dimension_numbers = #tpu.dot_dimension_numbers<[1], [0], [0], [1], [0, 0, 1, 1], [], []>} : vector<8x32xf32>, vector<32x64xf32>, vector<8x64xf32> -> vector<8x64xf32>
    %c0_3 = arith.constant 0 : index
    %c0_4 = arith.constant 0 : index
    %3 = vector.load %arg3[%c0_3, %c0_4] : memref<1x64xf32, #tpu.memory_space<vmem>>, vector<1x64xf32>
    %4 = vector.broadcast %3 : vector<1x64xf32> to vector<8x64xf32>
    %5 = arith.addf %2, %4 : vector<8x64xf32>
    %cst_5 = arith.constant 0.000000e+00 : f32
    %6 = vector.broadcast %cst_5 : f32 to vector<8x64xf32>
    %7 = arith.maximumf %5, %6 : vector<8x64xf32>
    %c0_6 = arith.constant 0 : index
    %c0_7 = arith.constant 0 : index
    %8 = vector.load %arg4[%c0_6, %c0_7] : memref<64x32xf32, #tpu.memory_space<vmem>>, vector<64x32xf32>
    %cst_8 = arith.constant dense<0.000000e+00> : vector<8x32xf32>
    %9 = tpu.matmul %7, %8, %cst_8 {dimension_numbers = #tpu.dot_dimension_numbers<[1], [0], [0], [1], [0, 0, 1, 1], [], []>} : vector<8x64xf32>, vector<64x32xf32>, vector<8x32xf32> -> vector<8x32xf32>
    %10 = arith.addf %0, %9 : vector<8x32xf32>
    %c0_9 = arith.constant 0 : index
    %c0_10 = arith.constant 0 : index
    %11 = vector.load %arg5[%c0_9, %c0_10] : memref<1x32xf32, #tpu.memory_space<vmem>>, vector<1x32xf32>
    %12 = vector.broadcast %11 : vector<1x32xf32> to vector<8x32xf32>
    %13 = arith.addf %10, %12 : vector<8x32xf32>
    %cst_11 = arith.constant dense<0.000000e+00> : vector<8xf32>
    %14 = vector.multi_reduction <add>, %13, %cst_11 [1] : vector<8x32xf32> to vector<8xf32>
    %15 = vector.shape_cast %14 : vector<8xf32> to vector<8x1xf32>
    %cst_12 = arith.constant 3.200000e+01 : f32
    %16 = vector.broadcast %cst_12 : f32 to vector<8x1xf32>
    %17 = arith.divf %15, %16 : vector<8x1xf32>
    %18 = vector.broadcast %17 : vector<8x1xf32> to vector<8x32xf32>
    %19 = arith.subf %13, %18 : vector<8x32xf32>
    %20 = arith.mulf %19, %19 : vector<8x32xf32>
    %cst_13 = arith.constant dense<0.000000e+00> : vector<8xf32>
    %21 = vector.multi_reduction <add>, %20, %cst_13 [1] : vector<8x32xf32> to vector<8xf32>
    %22 = vector.shape_cast %21 : vector<8xf32> to vector<8x1xf32>
    %cst_14 = arith.constant 3.200000e+01 : f32
    %23 = vector.broadcast %cst_14 : f32 to vector<8x1xf32>
    %24 = arith.divf %22, %23 : vector<8x1xf32>
    %25 = vector.broadcast %17 : vector<8x1xf32> to vector<8x32xf32>
    %26 = arith.subf %13, %25 : vector<8x32xf32>
    %cst_15 = arith.constant 9.99999974E-6 : f32
    %27 = vector.broadcast %cst_15 : f32 to vector<8x1xf32>
    %28 = arith.addf %24, %27 : vector<8x1xf32>
    %29 = math.rsqrt %28 : vector<8x1xf32>
    %30 = vector.broadcast %29 : vector<8x1xf32> to vector<8x32xf32>
    %31 = arith.mulf %26, %30 : vector<8x32xf32>
    %c0_16 = arith.constant 0 : index
    %c0_17 = arith.constant 0 : index
    %32 = vector.load %arg6[%c0_16, %c0_17] : memref<1x32xf32, #tpu.memory_space<vmem>>, vector<1x32xf32>
    %33 = vector.broadcast %32 : vector<1x32xf32> to vector<8x32xf32>
    %34 = arith.mulf %31, %33 : vector<8x32xf32>
    %c0_18 = arith.constant 0 : index
    %c0_19 = arith.constant 0 : index
    %35 = vector.load %arg7[%c0_18, %c0_19] : memref<1x32xf32, #tpu.memory_space<vmem>>, vector<1x32xf32>
    %36 = vector.broadcast %35 : vector<1x32xf32> to vector<8x32xf32>
    %37 = arith.addf %34, %36 : vector<8x32xf32>
    %c0_20 = arith.constant 0 : index
    %c0_21 = arith.constant 0 : index
    %38 = vector.load %arg8[%c0_20, %c0_21] : memref<8x32xf32, #tpu.memory_space<vmem>>, vector<8x32xf32>
    tpu.vector_store %arg8[%c0_20, %c0_21], %37 {strides = array<i32>} : memref<8x32xf32, #tpu.memory_space<vmem>>, vector<8x32xf32>,
    return
  }
  func.func @transform_0(%arg0: i32) -> (i32, i32) {
    %c0_i32 = arith.constant 0 : i32
    %c0_i32_0 = arith.constant 0 : i32
    return %arg0, %c0_i32 : i32, i32
  }
  func.func @transform_1(%arg0: i32) -> (i32, i32) {
    %c0_i32 = arith.constant 0 : i32
    %c0_i32_0 = arith.constant 0 : i32
    %c0_i32_1 = arith.constant 0 : i32
    return %c0_i32, %c0_i32_0 : i32, i32
  }
  func.func @transform_2(%arg0: i32) -> (i32, i32) {
    %c0_i32 = arith.constant 0 : i32
    %c0_i32_0 = arith.constant 0 : i32
    %c0_i32_1 = arith.constant 0 : i32
    return %c0_i32, %c0_i32_0 : i32, i32
  }
  func.func @transform_3(%arg0: i32) -> (i32, i32) {
    %c0_i32 = arith.constant 0 : i32
    %c0_i32_0 = arith.constant 0 : i32
    %c0_i32_1 = arith.constant 0 : i32
    return %c0_i32, %c0_i32_0 : i32, i32
  }
  func.func @transform_4(%arg0: i32) -> (i32, i32) {
    %c0_i32 = arith.constant 0 : i32
    %c0_i32_0 = arith.constant 0 : i32
    %c0_i32_1 = arith.constant 0 : i32
    return %c0_i32, %c0_i32_0 : i32, i32
  }
  func.func @transform_5(%arg0: i32) -> (i32, i32) {
    %c0_i32 = arith.constant 0 : i32
    %c0_i32_0 = arith.constant 0 : i32
    %c0_i32_1 = arith.constant 0 : i32
    return %c0_i32, %c0_i32_0 : i32, i32
  }
  func.func @transform_6(%arg0: i32) -> (i32, i32) {
    %c0_i32 = arith.constant 0 : i32
    %c0_i32_0 = arith.constant 0 : i32
    %c0_i32_1 = arith.constant 0 : i32
    return %c0_i32, %c0_i32_0 : i32, i32
  }
  func.func @transform_7(%arg0: i32) -> (i32, i32) {
    %c0_i32 = arith.constant 0 : i32
    %c0_i32_0 = arith.constant 0 : i32
    return %arg0, %c0_i32 : i32, i32
  }
}

</mosaic_0001>

<llo_original>
// kernel: relative_encoder_block.5
$region0: #{relative_encoder_block.5}
  #allocation0 [shape = 'u32[]', space=smem, size = 0x4, offset = 0x4, fixed_abs, tag = 'smem constant byte address 0x4 - core index']
  #allocation1 [shape = 'u32[72,128]{1,0:T(1,128)}', space=vmem, size = 0x9000, scoped, tag = 'internal scratch']
  #allocation2 [shape = 'f32[8,96]{1,0:T(8,128)}', space=vmem, size = 0x1000, scoped, tag = 'scratch operand']
  %s0 = inlined_call_operand.vmem [shape: f32[16,32], index: 0, kind: input, shape index: {}]
  %s1 = inlined_call_operand.vmem [shape: f32[32,96], index: 1, kind: input, shape index: {}]
  %s2 = inlined_call_operand.vmem [shape: f32[16,96], index: 2, kind: output, shape index: {}]
  %s3 = sld [smem:[#allocation0]]
  $region49: #{relative_encoder_block.5} parent=0
    _
  %s5 = ssub.s32 1, %s3
  %s6 = scalar_select 0, %s5, %s3
  loop: start=0, step=1, limit=4
  $region2: #{relative_encoder_block.5} parent=0 // loop_pre_header
    _
  $region3: #{relative_encoder_block.5} parent=0 // loop_header
    %s8 = sphi 0, %s12
    %p9 = scmp.ge.s32.totalorder %s8, 4
    %s15 = sphi 0, %s34
    %s16 = sphi 0, %s30
    %s17 = sphi 0, %s26
    %s18 = sphi 0, %s15
    %s19 = sphi 0, %s16
    %s20 = sphi 0, %s17
    %s21 = sphi 0, %s18
    %s22 = sphi 0, %s19
    %s23 = sphi 0, %s20
    %s39 = sphi 0, %s41
    %s42 = sphi 0, %s39
    %s43 = sphi 0, %s42
    %s59 = sphi 0, %s43
    %s67 = sphi 0, %s69
    %s70 = sphi 0, %s67
    %s71 = sphi 0, %s70
    %s87 = sphi 0, %s71
    %s95 = sphi 0, %s97
    %s98 = sphi 0, %s95
    %s99 = sphi 0, %s98
    %s115 = sphi 0, %s99
  $region4: #{relative_encoder_block.5} parent=0 // loop_header_branch
    %11 = sbr.rel (%p9) target = $region8
  $region5: #{relative_encoder_block.5} parent=0 // loop_body
    %s13 = ssub.s32 %s8, 1
    %s14 = ssub.s32 %s8, 2
    %s24 = sadd.s32 1, %s17
    %p25 = scmp.ge.s32.totalorder %s24, 1
    %s26 = scalar_select %p25, 0, %s24
    %s27 = sadd.s32 1, %s16
    %s28 = scalar_select %p25, %s27, %s16
    %p29 = scmp.ge.s32.totalorder %s28, 1
    %s30 = scalar_select %p29, 0, %s28
    %s31 = sadd.s32 1, %s15
    %s32 = scalar_select %p29, %s31, %s15
    %p33 = scmp.ge.s32.totalorder %s32, 2
    %s34 = scalar_select %p33, 0, %s32
    %s35 = ssub.s32 %s15, %s34
    %s36 = ssub.s32 %s17, %s26
    %s37 = sor.u32 %s35, %s36
    %p38 = scmp.eq.s32.totalorder %s37, 0
    %s40 = sadd.s32 %s39, 1
    %s41 = scalar_select %p38, %s39, %s40
    %p44 = pneg %p38
    %p45 = scmp.eq.s32.totalorder %s8, 1
    %p46 = por %p44, %p45
    %p47 = scmp.ne.s32.totalorder %s39, %s42
    %p48 = scmp.eq.s32.totalorder %s8, 0
    %p49 = por %p47, %p48
    %p50 = scmp.ne.s32.totalorder %s39, %s42
    %p51 = scmp.eq.s32.totalorder %s13, 1
    %p52 = por %p50, %p51
    %p53 = scmp.ne.s32.totalorder %s42, %s43
    %p54 = scmp.eq.s32.totalorder %s13, 0
    %p55 = por %p53, %p54
    %p56 = scmp.ne.s32.totalorder %s42, %s43
    %p57 = scmp.eq.s32.totalorder %s14, 1
    %p58 = por %p56, %p57
    %p60 = scmp.ne.s32.totalorder %s43, %s59
    %p61 = scmp.eq.s32.totalorder %s14, 0
    %p62 = por %p60, %p61
    %s63 = ssub.s32 %s17, %s26
    %s64 = ssub.s32 %s16, %s30
    %s65 = sor.u32 %s63, %s64
    %p66 = scmp.eq.s32.totalorder %s65, 0
    %s68 = sadd.s32 %s67, 1
    %s69 = scalar_select %p66, %s67, %s68
    %p72 = pneg %p66
    %p73 = scmp.eq.s32.totalorder %s8, 1
    %p74 = por %p72, %p73
    %p75 = scmp.ne.s32.totalorder %s67, %s70
    %p76 = scmp.eq.s32.totalorder %s8, 0
    %p77 = por %p75, %p76
    %p78 = scmp.ne.s32.totalorder %s67, %s70
    %p79 = scmp.eq.s32.totalorder %s13, 1
    %p80 = por %p78, %p79
    %p81 = scmp.ne.s32.totalorder %s70, %s71
    %p82 = scmp.eq.s32.totalorder %s13, 0
    %p83 = por %p81, %p82
    %p84 = scmp.ne.s32.totalorder %s70, %s71
    %p85 = scmp.eq.s32.totalorder %s14, 1
    %p86 = por %p84, %p85
    %p88 = scmp.ne.s32.totalorder %s71, %s87
    %p89 = scmp.eq.s32.totalorder %s14, 0
    %p90 = por %p88, %p89
    %s91 = ssub.s32 %s15, %s34
    %s92 = ssub.s32 %s16, %s30
    %s93 = sor.u32 %s91, %s92
    %p94 = scmp.eq.s32.totalorder %s93, 0
    %s96 = sadd.s32 %s95, 1
    %s97 = scalar_select %p94, %s95, %s96
    %p100 = pneg %p94
    %p101 = scmp.eq.s32.totalorder %s8, 1
    %p102 = por %p100, %p101
    %p103 = scmp.ne.s32.totalorder %s95, %s98
    %p104 = scmp.eq.s32.totalorder %s8, 0
    %p105 = por %p103, %p104
    %p106 = scmp.ne.s32.totalorder %s95, %s98
    %p107 = scmp.eq.s32.totalorder %s13, 1
    %p108 = por %p106, %p107
    %p109 = scmp.ne.s32.totalorder %s98, %s99
    %p110 = scmp.eq.s32.totalorder %s13, 0
    %p111 = por %p109, %p110
    %p112 = scmp.ne.s32.totalorder %s98, %s99
    %p113 = scmp.eq.s32.totalorder %s14, 1
    %p114 = por %p112, %p113
    %p116 = scmp.ne.s32.totalorder %s99, %s115
    %p117 = scmp.eq.s32.totalorder %s14, 0
    %p118 = por %p116, %p117
    %p119 = scmp.le.s32.totalorder 1, %s8
    %p120 = scmp.lt.s32.totalorder %s8, 3
    %p121 = pnand %p119, %p120
    %p122 = pneg %p121
    // Predicated region
    $region9: #{relative_encoder_block.5} parent=5 // pred_check
      _
    $region10: #{relative_encoder_block.5} parent=5 // pred_check_branch
      %124 = sbr.rel (%p121) target = $region12
    $region11: #{relative_encoder_block.5} parent=5 // pred_region
      %s125 = ssub.s32 %s8, 1
      // Predicated region
      $region13: #{relative_encoder_block.5} parent=11 // pred_check
        %p126 = pneg %p83
      $region14: #{relative_encoder_block.5} parent=11 // pred_check_branch
        %128 = sbr.rel (%p126) target = $region16
      $region15: #{relative_encoder_block.5} parent=11 // pred_region
        %s129 = smul.u32 4, %s20
        %p130 = scmp.lt.s32.totalorder %s129, 3
        %s131 = scalar_select %p130, %s129, 3
        %p132 = scmp.lt.s32.totalorder %s19, 0
        %s133 = scalar_select %p132, %s19, 0
        %s134 = sadd.s32 %s133, %s131
        %s135 = smul.addr %s134, 8
        %s136 = scalar_lea.vmem %s1, %s135
        %s137 = smul.u32 4, %s20
      $region16: #{relative_encoder_block.5} parent=11 // pred_fallthru
        _
    $region12: #{relative_encoder_block.5} parent=5 // pred_fallthru
      _
    %p138 = scmp.lt.s32.totalorder %s8, 2
    // Predicated region
    $region17: #{relative_encoder_block.5} parent=5 // pred_check
      %p139 = pneg %p138
    $region18: #{relative_encoder_block.5} parent=5 // pred_check_branch
      %141 = sbr.rel (%p139) target = $region20
    $region19: #{relative_encoder_block.5} parent=5 // pred_region
      // Predicated region
      $region21: #{relative_encoder_block.5} parent=19 // pred_check
        %p142 = pneg %p49
      $region22: #{relative_encoder_block.5} parent=19 // pred_check_branch
        %144 = sbr.rel (%p142) target = $region24
      $region23: #{relative_encoder_block.5} parent=19 // pred_region
        %p145 = scmp.lt.s32.totalorder %s15, 1
        %s146 = scalar_select %p145, %s15, 1
        %p147 = scmp.lt.s32.totalorder %s17, 0
        %s148 = scalar_select %p147, %s17, 0
        %s149 = sadd.s32 %s148, %s146
        %s150 = smul.addr %s149, 8
        %s151 = scalar_lea.vmem %s0, %s150
      $region24: #{relative_encoder_block.5} parent=19 // pred_fallthru
        _
    $region20: #{relative_encoder_block.5} parent=5 // pred_fallthru
      _
    %p152 = scmp.le.s32.totalorder 1, %s8
    %p153 = scmp.lt.s32.totalorder %s8, 3
    %p154 = pnand %p152, %p153
    %p155 = pneg %p154
    // Predicated region
    $region25: #{relative_encoder_block.5} parent=5 // pred_check
      _
    $region26: #{relative_encoder_block.5} parent=5 // pred_check_branch
      %157 = sbr.rel (%p154) target = $region28
    $region27: #{relative_encoder_block.5} parent=5 // pred_region
      %s158 = ssub.s32 %s8, 1
      %p159 = scmp.lt.s32.totalorder %s18, 1
      %s160 = scalar_select %p159, %s18, 1
      %p161 = scmp.lt.s32.totalorder %s20, 0
      %s162 = scalar_select %p161, %s20, 0
      %s163 = sadd.s32 %s162, %s160
      %s164 = smul.addr %s163, 8
      %s165 = scalar_lea.vmem %s0, %s164
      %p166 = pneg %p55
      %p167 = pneg %p52
      %s168 = smul.u32 4, %s20
      %p169 = scmp.lt.s32.totalorder %s168, 3
      %s170 = scalar_select %p169, %s168, 3
      %p171 = scmp.lt.s32.totalorder %s19, 0
      %s172 = scalar_select %p171, %s19, 0
      %s173 = sadd.s32 %s172, %s170
      %s174 = smul.addr %s173, 8
      %s175 = scalar_lea.vmem %s1, %s174
      %p176 = pneg %p83
      %p177 = pneg %p80
      %p178 = pneg %p111
      %p179 = pneg %p108
      %p180 = scmp.lt.s32.totalorder %s18, 1
      %s181 = scalar_select %p180, %s18, 1
      %p182 = scmp.lt.s32.totalorder %s19, 0
      %s183 = scalar_select %p182, %s19, 0
      %s184 = sadd.s32 %s183, %s181
      %s185 = smul.addr %s184, 8
      %s186 = scalar_lea.vmem %s2, %s185
      %p187 = scmp.lt.s32.totalorder %s18, 1
      %s188 = scalar_select %p187, %s18, 1
      %p189 = scmp.lt.s32.totalorder %s20, 0
      %s190 = scalar_select %p189, %s20, 0
      %s191 = sadd.s32 %s190, %s188
      %s192 = smul.addr %s191, 8
      %s193 = scalar_lea.vmem %s0, %s192
      %s194 = smul.u32 4, %s20
      %p195 = scmp.lt.s32.totalorder %s194, 3
      %s196 = scalar_select %p195, %s194, 3
      %p197 = scmp.lt.s32.totalorder %s19, 0
      %s198 = scalar_select %p197, %s19, 0
      %s199 = sadd.s32 %s198, %s196
      %s200 = smul.addr %s199, 8
      %s201 = scalar_lea.vmem %s1, %s200
      %s202 = smul.u32 4, %s20
      %p203 = scmp.lt.s32.totalorder %s18, 1
      %s204 = scalar_select %p203, %s18, 1
      %p205 = scmp.lt.s32.totalorder %s19, 0
      %s206 = scalar_select %p205, %s19, 0
      %s207 = sadd.s32 %s206, %s204
      %s208 = smul.addr %s207, 8
      %s209 = scalar_lea.vmem %s2, %s208
      %p210 = scmp.eq.s32.totalorder %s20, 0
      // Predicated region
      $region29: #{relative_encoder_block.5} parent=27 // pred_check
        %p211 = pneg %p210
      $region30: #{relative_encoder_block.5} parent=27 // pred_check_branch
        %213 = sbr.rel (%p211) target = $region32
      $region31: #{relative_encoder_block.5} parent=27 // pred_region
        %vm214 = vcmask 785408
        %215 = vst.msk [vmem:[#allocation2] sm:$0xff] %vm214, 0.0
      $region32: #{relative_encoder_block.5} parent=27 // pred_fallthru
        _
      %v216 = vld [vmem:[#allocation2] sm:$0xff]
      %v217 = vld [vmem:[%s193] sm:$0xff]
      %v218 = vld [vmem:[%s201] sm:$0xff]
      %v219 = vld [vmem:[%s201 + $0x8] sm:$0xff]
      %v220 = vld [vmem:[%s201 + $0x10] sm:$0xff]
      %v221 = vld [vmem:[%s201 + $0x18] sm:$0xff]
      %vm222 = vcmask 261120
      %v224 = vsel %vm222, %v217, 0
      %226 = vmatpush.msra.mxu0 0.0
      %227 = vmatpush.msra.mxu0 0.0
      %228 = vmatpush.msra.mxu0 0.0
      %229 = vmatpush.msra.mxu0 0.0
      %230 = vmatpush.msra.mxu0 0.0
      %231 = vmatpush.msra.mxu0 0.0
      %232 = vmatpush.msra.mxu0 0.0
      %233 = vmatpush.msra.mxu0 0.0
      %234 = vmatpush.msra.mxu0 0.0
      %235 = vmatpush.msra.mxu0 0.0
      %236 = vmatpush.msra.mxu0 0.0
      %237 = vmatpush.msra.mxu0 0.0
      %238 = vmatpush.msra.mxu0 %v221
      %239 = vmatpush.msra.mxu0 %v220
      %240 = vmatpush.msra.mxu0 %v219
      %241 = vmatpush.msra.mxu0 %v218
      %242 = vmatmul.f32.gmra.mxu0 %v224
      %v243 = vpop.f32.mrf.mxu0
      %v244 = vadd.f32 0.0, %v243
      %245 = vdwg.mxu0
      %v246 = vadd.f32 %v216, %v244
      %vm247 = vcmask 785408
      %248 = vst.msk [vmem:[#allocation2] sm:$0xff] %vm247, %v246
      // Predicated region
      $region33: #{relative_encoder_block.5} parent=27 // pred_check
        %p249 = pneg %p210
      $region34: #{relative_encoder_block.5} parent=27 // pred_check_branch
        %251 = sbr.rel (%p249) target = $region36
      $region35: #{relative_encoder_block.5} parent=27 // pred_region
        %v252 = vld [vmem:[#allocation2] sm:$0xff]
        %253 = vst.msk [vmem:[%s209] sm:$0xff] %vm247, %v252
      $region36: #{relative_encoder_block.5} parent=27 // pred_fallthru
        _
      %p254 = scmp.lt.s32.totalorder %s18, 1
      %s255 = scalar_select %p254, %s18, 1
      %p256 = scmp.lt.s32.totalorder %s19, 0
      %s257 = scalar_select %p256, %s19, 0
      %s258 = sadd.s32 %s257, %s255
      %s259 = smul.addr %s258, 8
      %s260 = scalar_lea.vmem %s2, %s259
      // Predicated region
      $region37: #{relative_encoder_block.5} parent=27 // pred_check
        %p261 = pneg %p108
      $region38: #{relative_encoder_block.5} parent=27 // pred_check_branch
        %263 = sbr.rel (%p261) target = $region40
      $region39: #{relative_encoder_block.5} parent=27 // pred_region
        _
      $region40: #{relative_encoder_block.5} parent=27 // pred_fallthru
        _
    $region28: #{relative_encoder_block.5} parent=5 // pred_fallthru
      _
    %p264 = scmp.le.s32.totalorder 2, %s8
    // Predicated region
    $region41: #{relative_encoder_block.5} parent=5 // pred_check
      %p265 = pneg %p264
    $region42: #{relative_encoder_block.5} parent=5 // pred_check_branch
      %267 = sbr.rel (%p265) target = $region44
    $region43: #{relative_encoder_block.5} parent=5 // pred_region
      %s268 = ssub.s32 %s8, 2
      // Predicated region
      $region45: #{relative_encoder_block.5} parent=43 // pred_check
        %p269 = pneg %p114
      $region46: #{relative_encoder_block.5} parent=43 // pred_check_branch
        %271 = sbr.rel (%p269) target = $region48
      $region47: #{relative_encoder_block.5} parent=43 // pred_region
        %p272 = scmp.lt.s32.totalorder %s21, 1
        %s273 = scalar_select %p272, %s21, 1
        %p274 = scmp.lt.s32.totalorder %s22, 0
        %s275 = scalar_select %p274, %s22, 0
        %s276 = sadd.s32 %s275, %s273
        %s277 = smul.addr %s276, 8
        %s278 = scalar_lea.vmem %s2, %s277
      $region48: #{relative_encoder_block.5} parent=43 // pred_fallthru
        _
    $region44: #{relative_encoder_block.5} parent=5 // pred_fallthru
      _
  $region6: #{relative_encoder_block.5} parent=0 // loop_footer
    %s12 = sadd.s32 1, %s8
  $region7: #{relative_encoder_block.5} parent=0 // loop_footer_branch
    %7 = sbr.rel target = $region3
  $region8: #{relative_encoder_block.5} parent=0 // loop_exit
    _

// kernel: relative_encoder_block.6
$region0: #{relative_encoder_block.6}
  #allocation0 [shape = 'u32[]', space=smem, size = 0x4, offset = 0x4, fixed_abs, tag = 'smem constant byte address 0x4 - core index']
  #allocation1 [shape = 'u32[72,128]{1,0:T(1,128)}', space=vmem, size = 0x9000, scoped, tag = 'internal scratch']
  #allocation2 [shape = 'f32[15,32]{1,0:T(8,128)}', space=vmem, size = 0x2000, scoped, tag = 'scratch operand']
  %s0 = inlined_call_operand.vmem [shape: f32[15,32], index: 0, kind: input, shape index: {}]
  %s1 = inlined_call_operand.vmem [shape: f32[32,32], index: 1, kind: input, shape index: {}]
  %s2 = inlined_call_operand.vmem [shape: f32[15,32], index: 2, kind: output, shape index: {}]
  %s3 = sld [smem:[#allocation0]]
  $region26: #{relative_encoder_block.6} parent=0
    _
  %s5 = ssub.s32 1, %s3
  %s6 = scalar_select 0, %s5, %s3
  // Predicated region
  $region2: #{relative_encoder_block.6} parent=0 // pred_check
    _
  $region3: #{relative_encoder_block.6} parent=0 // pred_check_branch
    %8 = sbr.rel (0) target = $region5
  $region4: #{relative_encoder_block.6} parent=0 // pred_region
    _
  $region5: #{relative_encoder_block.6} parent=0 // pred_fallthru
    _
  // Predicated region
  $region6: #{relative_encoder_block.6} parent=0 // pred_check
    _
  $region7: #{relative_encoder_block.6} parent=0 // pred_check_branch
    %10 = sbr.rel (0) target = $region9
  $region8: #{relative_encoder_block.6} parent=0 // pred_region
    _
  $region9: #{relative_encoder_block.6} parent=0 // pred_fallthru
    _
  %p11 = scmp.eq.s32.totalorder 0, 0
  // Predicated region
  $region10: #{relative_encoder_block.6} parent=0 // pred_check
    %p12 = pneg %p11
  $region11: #{relative_encoder_block.6} parent=0 // pred_check_branch
    %14 = sbr.rel (%p12) target = $region13
  $region12: #{relative_encoder_block.6} parent=0 // pred_region
    %vm15 = vcmask 261120
    %16 = vst.msk [vmem:[#allocation2] sm:$0xff] %vm15, 0.0
    %vm17 = vcmask 260096
    %18 = vst.msk [vmem:[#allocation2 + $0x8] sm:$0x7f] %vm17, 0.0
  $region13: #{relative_encoder_block.6} parent=0 // pred_fallthru
    _
  %v19 = vld [vmem:[#allocation2] sm:$0xff]
  %v20 = vld [vmem:[#allocation2 + $0x8] sm:$0x7f]
  %v21 = vld [vmem:[%s0] sm:$0xff]
  %v22 = vld [vmem:[%s0 + $0x8] sm:$0x7f]
  %v23 = vld [vmem:[%s1] sm:$0xff]
  %v24 = vld [vmem:[%s1 + $0x8] sm:$0xff]
  %v25 = vld [vmem:[%s1 + $0x10] sm:$0xff]
  %v26 = vld [vmem:[%s1 + $0x18] sm:$0xff]
  %vm27 = vcmask 261120
  %v29 = vsel %vm27, %v21, 0
  %v32 = vsel %vm27, %v22, 0
  %34 = vmatpush.msra.mxu0 0.0
  %35 = vmatpush.msra.mxu0 0.0
  %36 = vmatpush.msra.mxu0 0.0
  %37 = vmatpush.msra.mxu0 0.0
  %38 = vmatpush.msra.mxu0 0.0
  %39 = vmatpush.msra.mxu0 0.0
  %40 = vmatpush.msra.mxu0 0.0
  %41 = vmatpush.msra.mxu0 0.0
  %42 = vmatpush.msra.mxu0 0.0
  %43 = vmatpush.msra.mxu0 0.0
  %44 = vmatpush.msra.mxu0 0.0
  %45 = vmatpush.msra.mxu0 0.0
  %46 = vmatpush.msra.mxu0 %v26
  %47 = vmatpush.msra.mxu0 %v25
  %48 = vmatpush.msra.mxu0 %v24
  %49 = vmatpush.msra.mxu0 %v23
  %50 = vmatmul.f32.gmra.mxu0 %v29
  %v51 = vpop.f32.mrf.mxu0
  %v52 = vadd.f32 0.0, %v51
  %53 = vmatmul.f32.gmra.mxu0 %v32
  %v54 = vpop.f32.mrf.mxu0
  %v55 = vadd.f32 0.0, %v54
  %56 = vdwg.mxu0
  %v57 = vadd.f32 %v19, %v52
  %v58 = vadd.f32 %v20, %v55
  %59 = vst.msk [vmem:[#allocation2] sm:$0xff] %vm27, %v57
  %vm60 = vcmask 260096
  %61 = vst.msk [vmem:[#allocation2 + $0x8] sm:$0x7f] %vm60, %v58
  // Predicated region
  $region14: #{relative_encoder_block.6} parent=0 // pred_check
    %p62 = pneg %p11
  $region15: #{relative_encoder_block.6} parent=0 // pred_check_branch
    %64 = sbr.rel (%p62) target = $region17
  $region16: #{relative_encoder_block.6} parent=0 // pred_region
    %v65 = vld [vmem:[#allocation2] sm:$0xff]
    %v66 = vld [vmem:[#allocation2 + $0x8] sm:$0x7f]
    %67 = vst.msk [vmem:[%s2] sm:$0xff] %vm27, %v65
    %68 = vst.msk [vmem:[%s2 + $0x8] sm:$0x7f] %vm60, %v66
  $region17: #{relative_encoder_block.6} parent=0 // pred_fallthru
    _
  // Predicated region
  $region18: #{relative_encoder_block.6} parent=0 // pred_check
    _
  $region19: #{relative_encoder_block.6} parent=0 // pred_check_branch
    %70 = sbr.rel (0) target = $region21
  $region20: #{relative_encoder_block.6} parent=0 // pred_region
    _
  $region21: #{relative_encoder_block.6} parent=0 // pred_fallthru
    _
  // Predicated region
  $region22: #{relative_encoder_block.6} parent=0 // pred_check
    _
  $region23: #{relative_encoder_block.6} parent=0 // pred_check_branch
    %72 = sbr.rel (0) target = $region25
  $region24: #{relative_encoder_block.6} parent=0 // pred_region
    _
  $region25: #{relative_encoder_block.6} parent=0 // pred_fallthru
    _

// kernel: relative_encoder_block.8
$region0: #{relative_encoder_block.8}
  #allocation0 [shape = 'u32[]', space=smem, size = 0x4, offset = 0x4, fixed_abs, tag = 'smem constant byte address 0x4 - core index']
  #allocation1 [shape = 'u32[72,128]{1,0:T(1,128)}', space=vmem, size = 0x9000, scoped, tag = 'internal scratch']
  %s0 = inlined_call_operand.vmem [shape: f32[16,32], index: 0, kind: input, shape index: {}]
  %s1 = inlined_call_operand.vmem [shape: f32[16,32], index: 1, kind: input, shape index: {}]
  %s2 = inlined_call_operand.vmem [shape: f32[32,32], index: 2, kind: input, shape index: {}]
  %s3 = inlined_call_operand.vmem [shape: f32[1,32], index: 3, kind: input, shape index: {}]
  %s4 = inlined_call_operand.vmem [shape: f32[1,32], index: 4, kind: input, shape index: {}]
  %s5 = inlined_call_operand.vmem [shape: f32[1,32], index: 5, kind: input, shape index: {}]
  %s6 = inlined_call_operand.vmem [shape: f32[16,32], index: 6, kind: output, shape index: {}]
  %s7 = sld [smem:[#allocation0]]
  $region57: #{relative_encoder_block.8} parent=0
    _
  %s9 = ssub.s32 1, %s7
  %s10 = scalar_select 0, %s9, %s7
  loop: start=0, step=1, limit=4
  $region2: #{relative_encoder_block.8} parent=0 // loop_pre_header
    _
  $region3: #{relative_encoder_block.8} parent=0 // loop_header
    %s12 = sphi 0, %s16
    %p13 = scmp.ge.s32.totalorder %s12, 4
    %s22 = sphi 0, %s24
    %s25 = sphi 0, %s22
    %s26 = sphi 0, %s25
    %s42 = sphi 0, %s26
    %s48 = sphi 0, %s50
    %s51 = sphi 0, %s48
    %s52 = sphi 0, %s51
    %s68 = sphi 0, %s52
    %s72 = sphi 0, %s72
    %s74 = sphi 0, %s72
    %s75 = sphi 0, %s74
    %s89 = sphi 0, %s75
    %s93 = sphi 0, %s93
    %s95 = sphi 0, %s93
    %s96 = sphi 0, %s95
    %s110 = sphi 0, %s96
    %s114 = sphi 0, %s114
    %s116 = sphi 0, %s114
    %s117 = sphi 0, %s116
    %s131 = sphi 0, %s117
    %s135 = sphi 0, %s135
    %s137 = sphi 0, %s135
    %s138 = sphi 0, %s137
    %s152 = sphi 0, %s138
    %s158 = sphi 0, %s160
    %s161 = sphi 0, %s158
    %s162 = sphi 0, %s161
    %s178 = sphi 0, %s162
  $region4: #{relative_encoder_block.8} parent=0 // loop_header_branch
    %15 = sbr.rel (%p13) target = $region8
  $region5: #{relative_encoder_block.8} parent=0 // loop_body
    %s17 = ssub.s32 %s12, 1
    %s18 = ssub.s32 %s12, 2
    %s19 = sadd.s32 %s12, 1
    %s20 = ssub.s32 %s12, %s19
    %p21 = scmp.eq.s32.totalorder %s20, 0
    %s23 = sadd.s32 %s22, 1
    %s24 = scalar_select %p21, %s22, %s23
    %p27 = pneg %p21
    %p28 = scmp.eq.s32.totalorder %s12, 1
    %p29 = por %p27, %p28
    %p30 = scmp.ne.s32.totalorder %s22, %s25
    %p31 = scmp.eq.s32.totalorder %s12, 0
    %p32 = por %p30, %p31
    %p33 = scmp.ne.s32.totalorder %s22, %s25
    %p34 = scmp.eq.s32.totalorder %s17, 1
    %p35 = por %p33, %p34
    %p36 = scmp.ne.s32.totalorder %s25, %s26
    %p37 = scmp.eq.s32.totalorder %s17, 0
    %p38 = por %p36, %p37
    %p39 = scmp.ne.s32.totalorder %s25, %s26
    %p40 = scmp.eq.s32.totalorder %s18, 1
    %p41 = por %p39, %p40
    %p43 = scmp.ne.s32.totalorder %s26, %s42
    %p44 = scmp.eq.s32.totalorder %s18, 0
    %p45 = por %p43, %p44
    %s46 = ssub.s32 %s12, %s19
    %p47 = scmp.eq.s32.totalorder %s46, 0
    %s49 = sadd.s32 %s48, 1
    %s50 = scalar_select %p47, %s48, %s49
    %p53 = pneg %p47
    %p54 = scmp.eq.s32.totalorder %s12, 1
    %p55 = por %p53, %p54
    %p56 = scmp.ne.s32.totalorder %s48, %s51
    %p57 = scmp.eq.s32.totalorder %s12, 0
    %p58 = por %p56, %p57
    %p59 = scmp.ne.s32.totalorder %s48, %s51
    %p60 = scmp.eq.s32.totalorder %s17, 1
    %p61 = por %p59, %p60
    %p62 = scmp.ne.s32.totalorder %s51, %s52
    %p63 = scmp.eq.s32.totalorder %s17, 0
    %p64 = por %p62, %p63
    %p65 = scmp.ne.s32.totalorder %s51, %s52
    %p66 = scmp.eq.s32.totalorder %s18, 1
    %p67 = por %p65, %p66
    %p69 = scmp.ne.s32.totalorder %s52, %s68
    %p70 = scmp.eq.s32.totalorder %s18, 0
    %p71 = por %p69, %p70
    %s73 = sadd.s32 %s72, 1
    %p76 = scmp.eq.s32.totalorder %s12, 1
    %p77 = scmp.ne.s32.totalorder %s72, %s74
    %p78 = scmp.eq.s32.totalorder %s12, 0
    %p79 = por %p77, %p78
    %p80 = scmp.ne.s32.totalorder %s72, %s74
    %p81 = scmp.eq.s32.totalorder %s17, 1
    %p82 = por %p80, %p81
    %p83 = scmp.ne.s32.totalorder %s74, %s75
    %p84 = scmp.eq.s32.totalorder %s17, 0
    %p85 = por %p83, %p84
    %p86 = scmp.ne.s32.totalorder %s74, %s75
    %p87 = scmp.eq.s32.totalorder %s18, 1
    %p88 = por %p86, %p87
    %p90 = scmp.ne.s32.totalorder %s75, %s89
    %p91 = scmp.eq.s32.totalorder %s18, 0
    %p92 = por %p90, %p91
    %s94 = sadd.s32 %s93, 1
    %p97 = scmp.eq.s32.totalorder %s12, 1
    %p98 = scmp.ne.s32.totalorder %s93, %s95
    %p99 = scmp.eq.s32.totalorder %s12, 0
    %p100 = por %p98, %p99
    %p101 = scmp.ne.s32.totalorder %s93, %s95
    %p102 = scmp.eq.s32.totalorder %s17, 1
    %p103 = por %p101, %p102
    %p104 = scmp.ne.s32.totalorder %s95, %s96
    %p105 = scmp.eq.s32.totalorder %s17, 0
    %p106 = por %p104, %p105
    %p107 = scmp.ne.s32.totalorder %s95, %s96
    %p108 = scmp.eq.s32.totalorder %s18, 1
    %p109 = por %p107, %p108
    %p111 = scmp.ne.s32.totalorder %s96, %s110
    %p112 = scmp.eq.s32.totalorder %s18, 0
    %p113 = por %p111, %p112
    %s115 = sadd.s32 %s114, 1
    %p118 = scmp.eq.s32.totalorder %s12, 1
    %p119 = scmp.ne.s32.totalorder %s114, %s116
    %p120 = scmp.eq.s32.totalorder %s12, 0
    %p121 = por %p119, %p120
    %p122 = scmp.ne.s32.totalorder %s114, %s116
    %p123 = scmp.eq.s32.totalorder %s17, 1
    %p124 = por %p122, %p123
    %p125 = scmp.ne.s32.totalorder %s116, %s117
    %p126 = scmp.eq.s32.totalorder %s17, 0
    %p127 = por %p125, %p126
    %p128 = scmp.ne.s32.totalorder %s116, %s117
    %p129 = scmp.eq.s32.totalorder %s18, 1
    %p130 = por %p128, %p129
    %p132 = scmp.ne.s32.totalorder %s117, %s131
    %p133 = scmp.eq.s32.totalorder %s18, 0
    %p134 = por %p132, %p133
    %s136 = sadd.s32 %s135, 1
    %p139 = scmp.eq.s32.totalorder %s12, 1
    %p140 = scmp.ne.s32.totalorder %s135, %s137
    %p141 = scmp.eq.s32.totalorder %s12, 0
    %p142 = por %p140, %p141
    %p143 = scmp.ne.s32.totalorder %s135, %s137
    %p144 = scmp.eq.s32.totalorder %s17, 1
    %p145 = por %p143, %p144
    %p146 = scmp.ne.s32.totalorder %s137, %s138
    %p147 = scmp.eq.s32.totalorder %s17, 0
    %p148 = por %p146, %p147
    %p149 = scmp.ne.s32.totalorder %s137, %s138
    %p150 = scmp.eq.s32.totalorder %s18, 1
    %p151 = por %p149, %p150
    %p153 = scmp.ne.s32.totalorder %s138, %s152
    %p154 = scmp.eq.s32.totalorder %s18, 0
    %p155 = por %p153, %p154
    %s156 = ssub.s32 %s12, %s19
    %p157 = scmp.eq.s32.totalorder %s156, 0
    %s159 = sadd.s32 %s158, 1
    %s160 = scalar_select %p157, %s158, %s159
    %p163 = pneg %p157
    %p164 = scmp.eq.s32.totalorder %s12, 1
    %p165 = por %p163, %p164
    %p166 = scmp.ne.s32.totalorder %s158, %s161
    %p167 = scmp.eq.s32.totalorder %s12, 0
    %p168 = por %p166, %p167
    %p169 = scmp.ne.s32.totalorder %s158, %s161
    %p170 = scmp.eq.s32.totalorder %s17, 1
    %p171 = por %p169, %p170
    %p172 = scmp.ne.s32.totalorder %s161, %s162
    %p173 = scmp.eq.s32.totalorder %s17, 0
    %p174 = por %p172, %p173
    %p175 = scmp.ne.s32.totalorder %s161, %s162
    %p176 = scmp.eq.s32.totalorder %s18, 1
    %p177 = por %p175, %p176
    %p179 = scmp.ne.s32.totalorder %s162, %s178
    %p180 = scmp.eq.s32.totalorder %s18, 0
    %p181 = por %p179, %p180
    %p182 = scmp.le.s32.totalorder 1, %s12
    %p183 = scmp.lt.s32.totalorder %s12, 3
    %p184 = pnand %p182, %p183
    %p185 = pneg %p184
    // Predicated region
    $region9: #{relative_encoder_block.8} parent=5 // pred_check
      _
    $region10: #{relative_encoder_block.8} parent=5 // pred_check_branch
      %187 = sbr.rel (%p184) target = $region12
    $region11: #{relative_encoder_block.8} parent=5 // pred_region
      %s188 = ssub.s32 %s12, 1
      // Predicated region
      $region13: #{relative_encoder_block.8} parent=11 // pred_check
        %p189 = pneg %p85
      $region14: #{relative_encoder_block.8} parent=11 // pred_check_branch
        %191 = sbr.rel (%p189) target = $region16
      $region15: #{relative_encoder_block.8} parent=11 // pred_region
        _
      $region16: #{relative_encoder_block.8} parent=11 // pred_fallthru
        _
      // Predicated region
      $region17: #{relative_encoder_block.8} parent=11 // pred_check
        %p192 = pneg %p106
      $region18: #{relative_encoder_block.8} parent=11 // pred_check_branch
        %194 = sbr.rel (%p192) target = $region20
      $region19: #{relative_encoder_block.8} parent=11 // pred_region
        _
      $region20: #{relative_encoder_block.8} parent=11 // pred_fallthru
        _
      // Predicated region
      $region21: #{relative_encoder_block.8} parent=11 // pred_check
        %p195 = pneg %p127
      $region22: #{relative_encoder_block.8} parent=11 // pred_check_branch
        %197 = sbr.rel (%p195) target = $region24
      $region23: #{relative_encoder_block.8} parent=11 // pred_region
        _
      $region24: #{relative_encoder_block.8} parent=11 // pred_fallthru
        _
      // Predicated region
      $region25: #{relative_encoder_block.8} parent=11 // pred_check
        %p198 = pneg %p148
      $region26: #{relative_encoder_block.8} parent=11 // pred_check_branch
        %200 = sbr.rel (%p198) target = $region28
      $region27: #{relative_encoder_block.8} parent=11 // pred_region
        _
      $region28: #{relative_encoder_block.8} parent=11 // pred_fallthru
        _
    $region12: #{relative_encoder_block.8} parent=5 // pred_fallthru
      _
    %p201 = scmp.lt.s32.totalorder %s12, 2
    // Predicated region
    $region29: #{relative_encoder_block.8} parent=5 // pred_check
      %p202 = pneg %p201
    $region30: #{relative_encoder_block.8} parent=5 // pred_check_branch
      %204 = sbr.rel (%p202) target = $region32
    $region31: #{relative_encoder_block.8} parent=5 // pred_region
      // Predicated region
      $region33: #{relative_encoder_block.8} parent=31 // pred_check
        %p205 = pneg %p32
      $region34: #{relative_encoder_block.8} parent=31 // pred_check_branch
        %207 = sbr.rel (%p205) target = $region36
      $region35: #{relative_encoder_block.8} parent=31 // pred_region
        %p208 = scmp.lt.s32.totalorder %s12, 1
        %s209 = scalar_select %p208, %s12, 1
        %s210 = smul.addr %s209, 8
        %s211 = scalar_lea.vmem %s0, %s210
      $region36: #{relative_encoder_block.8} parent=31 // pred_fallthru
        _
      // Predicated region
      $region37: #{relative_encoder_block.8} parent=31 // pred_check
        %p212 = pneg %p58
      $region38: #{relative_encoder_block.8} parent=31 // pred_check_branch
        %214 = sbr.rel (%p212) target = $region40
      $region39: #{relative_encoder_block.8} parent=31 // pred_region
        %p215 = scmp.lt.s32.totalorder %s12, 1
        %s216 = scalar_select %p215, %s12, 1
        %s217 = smul.addr %s216, 8
        %s218 = scalar_lea.vmem %s1, %s217
      $region40: #{relative_encoder_block.8} parent=31 // pred_fallthru
        _
    $region32: #{relative_encoder_block.8} parent=5 // pred_fallthru
      _
    %p219 = scmp.le.s32.totalorder 1, %s12
    %p220 = scmp.lt.s32.totalorder %s12, 3
    %p221 = pnand %p219, %p220
    %p222 = pneg %p221
    // Predicated region
    $region41: #{relative_encoder_block.8} parent=5 // pred_check
      _
    $region42: #{relative_encoder_block.8} parent=5 // pred_check_branch
      %224 = sbr.rel (%p221) target = $region44
    $region43: #{relative_encoder_block.8} parent=5 // pred_region
      %s225 = ssub.s32 %s12, 1
      %p226 = scmp.lt.s32.totalorder %s17, 1
      %s227 = scalar_select %p226, %s17, 1
      %s228 = smul.addr %s227, 8
      %s229 = scalar_lea.vmem %s0, %s228
      %p230 = pneg %p38
      %p231 = pneg %p35
      %p232 = scmp.lt.s32.totalorder %s17, 1
      %s233 = scalar_select %p232, %s17, 1
      %s234 = smul.addr %s233, 8
      %s235 = scalar_lea.vmem %s1, %s234
      %p236 = pneg %p64
      %p237 = pneg %p61
      %p238 = pneg %p85
      %p239 = pneg %p82
      %p240 = pneg %p106
      %p241 = pneg %p103
      %p242 = pneg %p127
      %p243 = pneg %p124
      %p244 = pneg %p148
      %p245 = pneg %p145
      %p246 = pneg %p174
      %p247 = pneg %p171
      %p248 = scmp.lt.s32.totalorder %s17, 1
      %s249 = scalar_select %p248, %s17, 1
      %s250 = smul.addr %s249, 8
      %s251 = scalar_lea.vmem %s6, %s250
      %p252 = scmp.lt.s32.totalorder %s17, 1
      %s253 = scalar_select %p252, %s17, 1
      %s254 = smul.addr %s253, 8
      %s255 = scalar_lea.vmem %s0, %s254
      %p256 = scmp.lt.s32.totalorder %s17, 1
      %s257 = scalar_select %p256, %s17, 1
      %s258 = smul.addr %s257, 8
      %s259 = scalar_lea.vmem %s1, %s258
      %p260 = scmp.lt.s32.totalorder %s17, 1
      %s261 = scalar_select %p260, %s17, 1
      %s262 = smul.addr %s261, 8
      %s263 = scalar_lea.vmem %s6, %s262
      %v264 = vld [vmem:[%s255] sm:$0xff]
      %v265 = vld [vmem:[%s259] sm:$0xff]
      %v266 = vld [vmem:[%s2] sm:$0xff]
      %v267 = vld [vmem:[%s2 + $0x8] sm:$0xff]
      %v268 = vld [vmem:[%s2 + $0x10] sm:$0xff]
      %v269 = vld [vmem:[%s2 + $0x18] sm:$0xff]
      %vm270 = vcmask 261120
      %v272 = vsel %vm270, %v265, 0
      %274 = vmatpush.msra.mxu0 0.0
      %275 = vmatpush.msra.mxu0 0.0
      %276 = vmatpush.msra.mxu0 0.0
      %277 = vmatpush.msra.mxu0 0.0
      %278 = vmatpush.msra.mxu0 0.0
      %279 = vmatpush.msra.mxu0 0.0
      %280 = vmatpush.msra.mxu0 0.0
      %281 = vmatpush.msra.mxu0 0.0
      %282 = vmatpush.msra.mxu0 0.0
      %283 = vmatpush.msra.mxu0 0.0
      %284 = vmatpush.msra.mxu0 0.0
      %285 = vmatpush.msra.mxu0 0.0
      %286 = vmatpush.msra.mxu0 %v269
      %287 = vmatpush.msra.mxu0 %v268
      %288 = vmatpush.msra.mxu0 %v267
      %289 = vmatpush.msra.mxu0 %v266
      %290 = vmatmul.f32.gmra.mxu0 %v272
      %v291 = vpop.f32.mrf.mxu0
      %v292 = vadd.f32 0.0, %v291
      %293 = vdwg.mxu0
      %v294 = vadd.f32 %v264, %v292
      %v295 = vld [vmem:[%s3] sm:$0x1]
      %v297 = vperm.slane %v295, 0
      %v299 = vadd.f32 %v294, %v297
      %v300 = vsel %vm270, %v299, 0.0
      %301 = vadd.xlane.f32.xlu0 %v300
      %v302 = vpop.xlane.xlu0 %301
      %v303 = vrcp.pop 32.0
      %v304 = vmul.f32 32.0, %v303
      %v305 = vsub.f32 1.0, %v304
      %v306 = vmul.f32 %v303, %v305
      %v307 = vadd.f32 %v303, %v306
      %vm308 = vweird.f32 %v303
      %v309 = vsel %vm308, %v303, %v307
      %v310 = vmul.f32 %v302, %v309
      %v311 = vsub.f32 %v299, %v310
      %v312 = vmul.f32 %v311, %v311
      %v313 = vsel %vm270, %v312, 0.0
      %314 = vadd.xlane.f32.xlu0 %v313
      %v315 = vpop.xlane.xlu0 %314
      %v316 = vmul.f32 %v315, %v309
      %v317 = vadd.f32 %v316, 1e-05
      %v318 = vrsqrt.pop %v317
      %v319 = vmul.f32 %v318, %v317
      %v320 = vmul.f32 %v319, %v318
      %v321 = vmul.f32 0.5, %v320
      %v322 = vsub.f32 1.5, %v321
      %v323 = vmul.f32 %v318, %v322
      %vm324 = vweird.f32 %v317
      %vm325 = vweird.f32 %v318
      %vm326 = vmor %vm324, %vm325
      %v327 = vsel %vm326, %v318, %v323
      %v328 = vmul.f32 %v311, %v327
      %v329 = vld [vmem:[%s4] sm:$0x1]
      %v331 = vperm.slane %v329, 0
      %v333 = vmul.f32 %v328, %v331
      %v334 = vld [vmem:[%s5] sm:$0x1]
      %v336 = vperm.slane %v334, 0
      %v338 = vadd.f32 %v333, %v336
      %339 = vst.msk [vmem:[%s263] sm:$0xff] %vm270, %v338
      %p340 = scmp.lt.s32.totalorder %s17, 1
      %s341 = scalar_select %p340, %s17, 1
      %s342 = smul.addr %s341, 8
      %s343 = scalar_lea.vmem %s6, %s342
      // Predicated region
      $region45: #{relative_encoder_block.8} parent=43 // pred_check
        %p344 = pneg %p171
      $region46: #{relative_encoder_block.8} parent=43 // pred_check_branch
        %346 = sbr.rel (%p344) target = $region48
      $region47: #{relative_encoder_block.8} parent=43 // pred_region
        _
      $region48: #{relative_encoder_block.8} parent=43 // pred_fallthru
        _
    $region44: #{relative_encoder_block.8} parent=5 // pred_fallthru
      _
    %p347 = scmp.le.s32.totalorder 2, %s12
    // Predicated region
    $region49: #{relative_encoder_block.8} parent=5 // pred_check
      %p348 = pneg %p347
    $region50: #{relative_encoder_block.8} parent=5 // pred_check_branch
      %350 = sbr.rel (%p348) target = $region52
    $region51: #{relative_encoder_block.8} parent=5 // pred_region
      %s351 = ssub.s32 %s12, 2
      // Predicated region
      $region53: #{relative_encoder_block.8} parent=51 // pred_check
        %p352 = pneg %p177
      $region54: #{relative_encoder_block.8} parent=51 // pred_check_branch
        %354 = sbr.rel (%p352) target = $region56
      $region55: #{relative_encoder_block.8} parent=51 // pred_region
        %p355 = scmp.lt.s32.totalorder %s18, 1
        %s356 = scalar_select %p355, %s18, 1
        %s357 = smul.addr %s356, 8
        %s358 = scalar_lea.vmem %s6, %s357
      $region56: #{relative_encoder_block.8} parent=51 // pred_fallthru
        _
    $region52: #{relative_encoder_block.8} parent=5 // pred_fallthru
      _
  $region6: #{relative_encoder_block.8} parent=0 // loop_footer
    %s16 = sadd.s32 1, %s12
  $region7: #{relative_encoder_block.8} parent=0 // loop_footer_branch
    %11 = sbr.rel target = $region3
  $region8: #{relative_encoder_block.8} parent=0 // loop_exit
    _

// kernel: relative_encoder_block.7
$region0: #{relative_encoder_block.7}
  #allocation0 [shape = 'u32[]', space=smem, size = 0x4, offset = 0x4, fixed_abs, tag = 'smem constant byte address 0x4 - core index']
  #allocation1 [shape = 'u32[72,128]{1,0:T(1,128)}', space=vmem, size = 0x9000, scoped, tag = 'internal scratch']
  %s0 = inlined_call_operand.vmem [shape: f32[16,96], index: 0, kind: input, shape index: {}]
  %s1 = inlined_call_operand.vmem [shape: f32[15,32], index: 1, kind: input, shape index: {}]
  %s2 = inlined_call_operand.vmem [shape: f32[1,32], index: 2, kind: input, shape index: {}]
  %s3 = inlined_call_operand.vmem [shape: f32[1,32], index: 3, kind: input, shape index: {}]
  %s4 = inlined_call_operand.vmem [shape: f32[16,32], index: 4, kind: output, shape index: {}]
  %s5 = sld [smem:[#allocation0]]
  $region49: #{relative_encoder_block.7} parent=0
    _
  %s7 = ssub.s32 1, %s5
  %s8 = scalar_select 0, %s7, %s5
  loop: start=0, step=1, limit=4
  $region2: #{relative_encoder_block.7} parent=0 // loop_pre_header
    _
  $region3: #{relative_encoder_block.7} parent=0 // loop_header
    %s10 = sphi 0, %s14
    %p11 = scmp.ge.s32.totalorder %s10, 4
    %s20 = sphi 0, %s22
    %s23 = sphi 0, %s20
    %s24 = sphi 0, %s23
    %s40 = sphi 0, %s24
    %s44 = sphi 0, %s44
    %s46 = sphi 0, %s44
    %s47 = sphi 0, %s46
    %s61 = sphi 0, %s47
    %s65 = sphi 0, %s65
    %s67 = sphi 0, %s65
    %s68 = sphi 0, %s67
    %s82 = sphi 0, %s68
    %s86 = sphi 0, %s86
    %s88 = sphi 0, %s86
    %s89 = sphi 0, %s88
    %s103 = sphi 0, %s89
    %s109 = sphi 0, %s111
    %s112 = sphi 0, %s109
    %s113 = sphi 0, %s112
    %s129 = sphi 0, %s113
  $region4: #{relative_encoder_block.7} parent=0 // loop_header_branch
    %13 = sbr.rel (%p11) target = $region8
  $region5: #{relative_encoder_block.7} parent=0 // loop_body
    %s15 = ssub.s32 %s10, 1
    %s16 = ssub.s32 %s10, 2
    %s17 = sadd.s32 %s10, 1
    %s18 = ssub.s32 %s10, %s17
    %p19 = scmp.eq.s32.totalorder %s18, 0
    %s21 = sadd.s32 %s20, 1
    %s22 = scalar_select %p19, %s20, %s21
    %p25 = pneg %p19
    %p26 = scmp.eq.s32.totalorder %s10, 1
    %p27 = por %p25, %p26
    %p28 = scmp.ne.s32.totalorder %s20, %s23
    %p29 = scmp.eq.s32.totalorder %s10, 0
    %p30 = por %p28, %p29
    %p31 = scmp.ne.s32.totalorder %s20, %s23
    %p32 = scmp.eq.s32.totalorder %s15, 1
    %p33 = por %p31, %p32
    %p34 = scmp.ne.s32.totalorder %s23, %s24
    %p35 = scmp.eq.s32.totalorder %s15, 0
    %p36 = por %p34, %p35
    %p37 = scmp.ne.s32.totalorder %s23, %s24
    %p38 = scmp.eq.s32.totalorder %s16, 1
    %p39 = por %p37, %p38
    %p41 = scmp.ne.s32.totalorder %s24, %s40
    %p42 = scmp.eq.s32.totalorder %s16, 0
    %p43 = por %p41, %p42
    %s45 = sadd.s32 %s44, 1
    %p48 = scmp.eq.s32.totalorder %s10, 1
    %p49 = scmp.ne.s32.totalorder %s44, %s46
    %p50 = scmp.eq.s32.totalorder %s10, 0
    %p51 = por %p49, %p50
    %p52 = scmp.ne.s32.totalorder %s44, %s46
    %p53 = scmp.eq.s32.totalorder %s15, 1
    %p54 = por %p52, %p53
    %p55 = scmp.ne.s32.totalorder %s46, %s47
    %p56 = scmp.eq.s32.totalorder %s15, 0
    %p57 = por %p55, %p56
    %p58 = scmp.ne.s32.totalorder %s46, %s47
    %p59 = scmp.eq.s32.totalorder %s16, 1
    %p60 = por %p58, %p59
    %p62 = scmp.ne.s32.totalorder %s47, %s61
    %p63 = scmp.eq.s32.totalorder %s16, 0
    %p64 = por %p62, %p63
    %s66 = sadd.s32 %s65, 1
    %p69 = scmp.eq.s32.totalorder %s10, 1
    %p70 = scmp.ne.s32.totalorder %s65, %s67
    %p71 = scmp.eq.s32.totalorder %s10, 0
    %p72 = por %p70, %p71
    %p73 = scmp.ne.s32.totalorder %s65, %s67
    %p74 = scmp.eq.s32.totalorder %s15, 1
    %p75 = por %p73, %p74
    %p76 = scmp.ne.s32.totalorder %s67, %s68
    %p77 = scmp.eq.s32.totalorder %s15, 0
    %p78 = por %p76, %p77
    %p79 = scmp.ne.s32.totalorder %s67, %s68
    %p80 = scmp.eq.s32.totalorder %s16, 1
    %p81 = por %p79, %p80
    %p83 = scmp.ne.s32.totalorder %s68, %s82
    %p84 = scmp.eq.s32.totalorder %s16, 0
    %p85 = por %p83, %p84
    %s87 = sadd.s32 %s86, 1
    %p90 = scmp.eq.s32.totalorder %s10, 1
    %p91 = scmp.ne.s32.totalorder %s86, %s88
    %p92 = scmp.eq.s32.totalorder %s10, 0
    %p93 = por %p91, %p92
    %p94 = scmp.ne.s32.totalorder %s86, %s88
    %p95 = scmp.eq.s32.totalorder %s15, 1
    %p96 = por %p94, %p95
    %p97 = scmp.ne.s32.totalorder %s88, %s89
    %p98 = scmp.eq.s32.totalorder %s15, 0
    %p99 = por %p97, %p98
    %p100 = scmp.ne.s32.totalorder %s88, %s89
    %p101 = scmp.eq.s32.totalorder %s16, 1
    %p102 = por %p100, %p101
    %p104 = scmp.ne.s32.totalorder %s89, %s103
    %p105 = scmp.eq.s32.totalorder %s16, 0
    %p106 = por %p104, %p105
    %s107 = ssub.s32 %s10, %s17
    %p108 = scmp.eq.s32.totalorder %s107, 0
    %s110 = sadd.s32 %s109, 1
    %s111 = scalar_select %p108, %s109, %s110
    %p114 = pneg %p108
    %p115 = scmp.eq.s32.totalorder %s10, 1
    %p116 = por %p114, %p115
    %p117 = scmp.ne.s32.totalorder %s109, %s112
    %p118 = scmp.eq.s32.totalorder %s10, 0
    %p119 = por %p117, %p118
    %p120 = scmp.ne.s32.totalorder %s109, %s112
    %p121 = scmp.eq.s32.totalorder %s15, 1
    %p122 = por %p120, %p121
    %p123 = scmp.ne.s32.totalorder %s112, %s113
    %p124 = scmp.eq.s32.totalorder %s15, 0
    %p125 = por %p123, %p124
    %p126 = scmp.ne.s32.totalorder %s112, %s113
    %p127 = scmp.eq.s32.totalorder %s16, 1
    %p128 = por %p126, %p127
    %p130 = scmp.ne.s32.totalorder %s113, %s129
    %p131 = scmp.eq.s32.totalorder %s16, 0
    %p132 = por %p130, %p131
    %p133 = scmp.le.s32.totalorder 1, %s10
    %p134 = scmp.lt.s32.totalorder %s10, 3
    %p135 = pnand %p133, %p134
    %p136 = pneg %p135
    // Predicated region
    $region9: #{relative_encoder_block.7} parent=5 // pred_check
      _
    $region10: #{relative_encoder_block.7} parent=5 // pred_check_branch
      %138 = sbr.rel (%p135) target = $region12
    $region11: #{relative_encoder_block.7} parent=5 // pred_region
      %s139 = ssub.s32 %s10, 1
      // Predicated region
      $region13: #{relative_encoder_block.7} parent=11 // pred_check
        %p140 = pneg %p57
      $region14: #{relative_encoder_block.7} parent=11 // pred_check_branch
        %142 = sbr.rel (%p140) target = $region16
      $region15: #{relative_encoder_block.7} parent=11 // pred_region
        _
      $region16: #{relative_encoder_block.7} parent=11 // pred_fallthru
        _
      // Predicated region
      $region17: #{relative_encoder_block.7} parent=11 // pred_check
        %p143 = pneg %p78
      $region18: #{relative_encoder_block.7} parent=11 // pred_check_branch
        %145 = sbr.rel (%p143) target = $region20
      $region19: #{relative_encoder_block.7} parent=11 // pred_region
        _
      $region20: #{relative_encoder_block.7} parent=11 // pred_fallthru
        _
      // Predicated region
      $region21: #{relative_encoder_block.7} parent=11 // pred_check
        %p146 = pneg %p99
      $region22: #{relative_encoder_block.7} parent=11 // pred_check_branch
        %148 = sbr.rel (%p146) target = $region24
      $region23: #{relative_encoder_block.7} parent=11 // pred_region
        _
      $region24: #{relative_encoder_block.7} parent=11 // pred_fallthru
        _
    $region12: #{relative_encoder_block.7} parent=5 // pred_fallthru
      _
    %p149 = scmp.lt.s32.totalorder %s10, 2
    // Predicated region
    $region25: #{relative_encoder_block.7} parent=5 // pred_check
      %p150 = pneg %p149
    $region26: #{relative_encoder_block.7} parent=5 // pred_check_branch
      %152 = sbr.rel (%p150) target = $region28
    $region27: #{relative_encoder_block.7} parent=5 // pred_region
      // Predicated region
      $region29: #{relative_encoder_block.7} parent=27 // pred_check
        %p153 = pneg %p30
      $region30: #{relative_encoder_block.7} parent=27 // pred_check_branch
        %155 = sbr.rel (%p153) target = $region32
      $region31: #{relative_encoder_block.7} parent=27 // pred_region
        %p156 = scmp.lt.s32.totalorder %s10, 1
        %s157 = scalar_select %p156, %s10, 1
        %s158 = smul.addr %s157, 8
        %s159 = scalar_lea.vmem %s0, %s158
      $region32: #{relative_encoder_block.7} parent=27 // pred_fallthru
        _
    $region28: #{relative_encoder_block.7} parent=5 // pred_fallthru
      _
    %p160 = scmp.le.s32.totalorder 1, %s10
    %p161 = scmp.lt.s32.totalorder %s10, 3
    %p162 = pnand %p160, %p161
    %p163 = pneg %p162
    // Predicated region
    $region33: #{relative_encoder_block.7} parent=5 // pred_check
      _
    $region34: #{relative_encoder_block.7} parent=5 // pred_check_branch
      %165 = sbr.rel (%p162) target = $region36
    $region35: #{relative_encoder_block.7} parent=5 // pred_region
      %s166 = ssub.s32 %s10, 1
      %p167 = scmp.lt.s32.totalorder %s15, 1
      %s168 = scalar_select %p167, %s15, 1
      %s169 = smul.addr %s168, 8
      %s170 = scalar_lea.vmem %s0, %s169
      %p171 = pneg %p36
      %p172 = pneg %p33
      %p173 = pneg %p57
      %p174 = pneg %p54
      %p175 = pneg %p78
      %p176 = pneg %p75
      %p177 = pneg %p99
      %p178 = pneg %p96
      %p179 = pneg %p125
      %p180 = pneg %p122
      %p181 = scmp.lt.s32.totalorder %s15, 1
      %s182 = scalar_select %p181, %s15, 1
      %s183 = smul.addr %s182, 8
      %s184 = scalar_lea.vmem %s4, %s183
      %p185 = scmp.lt.s32.totalorder %s15, 1
      %s186 = scalar_select %p185, %s15, 1
      %s187 = smul.addr %s186, 8
      %s188 = scalar_lea.vmem %s0, %s187
      %p189 = scmp.lt.s32.totalorder %s15, 1
      %s190 = scalar_select %p189, %s15, 1
      %s191 = smul.addr %s190, 8
      %s192 = scalar_lea.vmem %s4, %s191
      %v193 = vld [vmem:[%s188] sm:$0xff]
      %v194 = vld [vmem:[%s1] sm:$0xff]
      %v195 = vld [vmem:[%s1 + $0x8] sm:$0x7f]
      %v196 = vld [vmem:[%s2] sm:$0x1]
      %v197 = vld [vmem:[%s3] sm:$0x1]
      %v198 = vlaneseq
      %v199 = vshrl.u32 %v198, 7
      %v200 = vlaneseq
      %v201 = vand.u32 %v200, 127
      %vm202 = vcmp.eq.s32.totalorder %v199, %v201
      %v203 = vsel %vm202, 1, 0
      %v204 = vcvt.s32.f32 %v203
      %v205 = vadd.f32 %v204, 1.0
      %v207 = vperm.slane %v196, 0
      %v209 = vadd.f32 %v193, %v207
      %v211 = vperm.slane %v197, 0
      %v213 = vadd.f32 %v193, %v211
      %vm214 = vcmask 64512
      %v216 = vsel %vm214, %v213, 0
      %v219 = vsel %vm214, %v194, 0
      %v222 = vsel %vm214, %v195, 0
      %224 = vmatpush.xpose.msra.mxu0 0.0
      %225 = vmatpush.xpose.msra.mxu0 0.0
      %226 = vmatpush.xpose.msra.mxu0 0.0
      %227 = vmatpush.xpose.msra.mxu0 0.0
      %228 = vmatpush.xpose.msra.mxu0 0.0
      %229 = vmatpush.xpose.msra.mxu0 0.0
      %230 = vmatpush.xpose.msra.mxu0 0.0
      %231 = vmatpush.xpose.msra.mxu0 0.0
      %232 = vmatpush.xpose.msra.mxu0 0.0
      %233 = vmatpush.xpose.msra.mxu0 0.0
      %234 = vmatpush.xpose.msra.mxu0 0.0
      %235 = vmatpush.xpose.msra.mxu0 0.0
      %236 = vmatpush.xpose.msra.mxu0 0.0
      %237 = vmatpush.xpose.msra.mxu0 0.0
      %238 = vmatpush.xpose.msra.mxu0 %v222
      %239 = vmatpush.xpose.msra.mxu0 %v219
      %240 = vmatmul.f32.gmra.mxu0 %v216
      %v241 = vpop.f32.mrf.mxu0
      %v242 = vadd.f32 0.0, %v241
      %243 = vdwg.mxu0
      %245 = vrot.lane.b32.xlu0 %v242, 1
      %v246 = vpop.permute.xlu0 %245
      %248 = vrot.lane.b32.xlu0 %v242, 2
      %v249 = vpop.permute.xlu0 %248
      %251 = vrot.lane.b32.xlu0 %v242, 3
      %v252 = vpop.permute.xlu0 %251
      %254 = vrot.lane.b32.xlu0 %v242, 4
      %v255 = vpop.permute.xlu0 %254
      %257 = vrot.lane.b32.xlu0 %v242, 5
      %v258 = vpop.permute.xlu0 %257
      %260 = vrot.lane.b32.xlu0 %v242, 6
      %v261 = vpop.permute.xlu0 %260
      %263 = vrot.lane.b32.xlu0 %v242, 7
      %v264 = vpop.permute.xlu0 %263
      %vm266 = vcmask 1040384
      %v267 = vsel %vm266, %v242, %v246
      %vm268 = vcmask 1041408
      %v269 = vsel %vm268, %v267, %v249
      %vm270 = vcmask 1042432
      %v271 = vsel %vm270, %v269, %v252
      %vm272 = vcmask 1043456
      %v273 = vsel %vm272, %v271, %v255
      %vm274 = vcmask 1044480
      %v275 = vsel %vm274, %v273, %v258
      %vm276 = vcmask 1045504
      %v277 = vsel %vm276, %v275, %v261
      %vm278 = vcmask 1046528
      %v279 = vsel %vm278, %v277, %v264
      %281 = vrot.lane.b32.xlu0 %v279, 121
      %v282 = vpop.permute.xlu0 %281
      %v284 = vmul.f32 %v205, %v282
      %286 = vrot.lane.b32.xlu0 %v193, 96
      %v287 = vpop.permute.xlu0 %286
      %v289 = vsel %vm214, %v209, 0
      %v291 = vsel %vm214, %v287, 0
      %293 = vmatpush.xpose.msra.mxu0 0.0
      %294 = vmatpush.xpose.msra.mxu0 0.0
      %295 = vmatpush.xpose.msra.mxu0 0.0
      %296 = vmatpush.xpose.msra.mxu0 0.0
      %297 = vmatpush.xpose.msra.mxu0 0.0
      %298 = vmatpush.xpose.msra.mxu0 0.0
      %299 = vmatpush.xpose.msra.mxu0 0.0
      %300 = vmatpush.xpose.msra.mxu0 0.0
      %301 = vmatpush.xpose.msra.mxu0 0.0
      %302 = vmatpush.xpose.msra.mxu0 0.0
      %303 = vmatpush.xpose.msra.mxu0 0.0
      %304 = vmatpush.xpose.msra.mxu0 0.0
      %305 = vmatpush.xpose.msra.mxu0 0.0
      %306 = vmatpush.xpose.msra.mxu0 0.0
      %307 = vmatpush.xpose.msra.mxu0 0.0
      %308 = vmatpush.xpose.msra.mxu0 %v291
      %309 = vmatmul.f32.gmra.mxu0 %v289
      %v310 = vpop.f32.mrf.mxu0
      %v311 = vadd.f32 %v284, %v310
      %312 = vdwg.mxu0
      %v313 = vsel %vm214, %v311, -inf
      %314 = vmax.xlane.f32.xlu0 %v313
      %v315 = vpop.xlane.xlu0 %314
      %v316 = vsub.f32 %v311, %v315
      %v317 = vmul.f32 %v316, 1.442695
      %v318 = vpow.pop %v317
      %v319 = vsel %vm214, %v318, 0.0
      %320 = vadd.xlane.f32.xlu0 %v319
      %v321 = vpop.xlane.xlu0 %320
      %v322 = vrcp.pop %v321
      %v323 = vmul.f32 %v318, %v322
      %324 = vrot.lane.b32.xlu0 %v193, 64
      %v325 = vpop.permute.xlu0 %324
      %v328 = vsel %vm214, %v323, 0
      %330 = vmatpush.msra.mxu0 0.0
      %331 = vmatpush.msra.mxu0 0.0
      %332 = vmatpush.msra.mxu0 0.0
      %333 = vmatpush.msra.mxu0 0.0
      %334 = vmatpush.msra.mxu0 0.0
      %335 = vmatpush.msra.mxu0 0.0
      %336 = vmatpush.msra.mxu0 0.0
      %337 = vmatpush.msra.mxu0 0.0
      %338 = vmatpush.msra.mxu0 0.0
      %339 = vmatpush.msra.mxu0 0.0
      %340 = vmatpush.msra.mxu0 0.0
      %341 = vmatpush.msra.mxu0 0.0
      %342 = vmatpush.msra.mxu0 0.0
      %343 = vmatpush.msra.mxu0 0.0
      %344 = vmatpush.msra.mxu0 0.0
      %345 = vmatpush.msra.mxu0 %v325
      %346 = vmatmul.f32.gmra.mxu0 %v328
      %v347 = vpop.f32.mrf.mxu0
      %v348 = vadd.f32 0.0, %v347
      %349 = vdwg.mxu0
      %350 = vrot.lane.b32.xlu0 %v213, 120
      %v351 = vpop.permute.xlu0 %350
      %352 = vrot.lane.b32.xlu0 %v194, 120
      %v353 = vpop.permute.xlu0 %352
      %354 = vrot.lane.b32.xlu0 %v195, 120
      %v355 = vpop.permute.xlu0 %354
      %v356 = vsel %vm214, %v351, 0
      %v358 = vsel %vm214, %v353, 0
      %v360 = vsel %vm214, %v355, 0
      %362 = vmatpush.xpose.msra.mxu0 0.0
      %363 = vmatpush.xpose.msra.mxu0 0.0
      %364 = vmatpush.xpose.msra.mxu0 0.0
      %365 = vmatpush.xpose.msra.mxu0 0.0
      %366 = vmatpush.xpose.msra.mxu0 0.0
      %367 = vmatpush.xpose.msra.mxu0 0.0
      %368 = vmatpush.xpose.msra.mxu0 0.0
      %369 = vmatpush.xpose.msra.mxu0 0.0
      %370 = vmatpush.xpose.msra.mxu0 0.0
      %371 = vmatpush.xpose.msra.mxu0 0.0
      %372 = vmatpush.xpose.msra.mxu0 0.0
      %373 = vmatpush.xpose.msra.mxu0 0.0
      %374 = vmatpush.xpose.msra.mxu0 0.0
      %375 = vmatpush.xpose.msra.mxu0 0.0
      %376 = vmatpush.xpose.msra.mxu0 %v360
      %377 = vmatpush.xpose.msra.mxu0 %v358
      %378 = vmatmul.f32.gmra.mxu0 %v356
      %v379 = vpop.f32.mrf.mxu0
      %v380 = vadd.f32 0.0, %v379
      %381 = vdwg.mxu0
      %383 = vrot.lane.b32.xlu0 %v380, 1
      %v384 = vpop.permute.xlu0 %383
      %386 = vrot.lane.b32.xlu0 %v380, 2
      %v387 = vpop.permute.xlu0 %386
      %389 = vrot.lane.b32.xlu0 %v380, 3
      %v390 = vpop.permute.xlu0 %389
      %392 = vrot.lane.b32.xlu0 %v380, 4
      %v393 = vpop.permute.xlu0 %392
      %395 = vrot.lane.b32.xlu0 %v380, 5
      %v396 = vpop.permute.xlu0 %395
      %398 = vrot.lane.b32.xlu0 %v380, 6
      %v399 = vpop.permute.xlu0 %398
      %401 = vrot.lane.b32.xlu0 %v380, 7
      %v402 = vpop.permute.xlu0 %401
      %v404 = vsel %vm266, %v380, %v384
      %v405 = vsel %vm268, %v404, %v387
      %v406 = vsel %vm270, %v405, %v390
      %v407 = vsel %vm272, %v406, %v393
      %v408 = vsel %vm274, %v407, %v396
      %v409 = vsel %vm276, %v408, %v399
      %v410 = vsel %vm278, %v409, %v402
      %412 = vrot.lane.b32.xlu0 %v410, 121
      %v413 = vpop.permute.xlu0 %412
      %v415 = vmul.f32 %v205, %v413
      %416 = vrot.lane.b32.xlu0 %v209, 120
      %v417 = vpop.permute.xlu0 %416
      %418 = vrot.lane.b32.xlu0 %v193, 88
      %v419 = vpop.permute.xlu0 %418
      %v420 = vsel %vm214, %v417, 0
      %v422 = vsel %vm214, %v419, 0
      %424 = vmatpush.xpose.msra.mxu0 0.0
      %425 = vmatpush.xpose.msra.mxu0 0.0
      %426 = vmatpush.xpose.msra.mxu0 0.0
      %427 = vmatpush.xpose.msra.mxu0 0.0
      %428 = vmatpush.xpose.msra.mxu0 0.0
      %429 = vmatpush.xpose.msra.mxu0 0.0
      %430 = vmatpush.xpose.msra.mxu0 0.0
      %431 = vmatpush.xpose.msra.mxu0 0.0
      %432 = vmatpush.xpose.msra.mxu0 0.0
      %433 = vmatpush.xpose.msra.mxu0 0.0
      %434 = vmatpush.xpose.msra.mxu0 0.0
      %435 = vmatpush.xpose.msra.mxu0 0.0
      %436 = vmatpush.xpose.msra.mxu0 0.0
      %437 = vmatpush.xpose.msra.mxu0 0.0
      %438 = vmatpush.xpose.msra.mxu0 0.0
      %439 = vmatpush.xpose.msra.mxu0 %v422
      %440 = vmatmul.f32.gmra.mxu0 %v420
      %v441 = vpop.f32.mrf.mxu0
      %v442 = vadd.f32 %v415, %v441
      %443 = vdwg.mxu0
      %v444 = vsel %vm214, %v442, -inf
      %445 = vmax.xlane.f32.xlu0 %v444
      %v446 = vpop.xlane.xlu0 %445
      %v447 = vsub.f32 %v442, %v446
      %v448 = vmul.f32 %v447, 1.442695
      %v449 = vpow.pop %v448
      %v450 = vsel %vm214, %v449, 0.0
      %451 = vadd.xlane.f32.xlu0 %v450
      %v452 = vpop.xlane.xlu0 %451
      %v453 = vrcp.pop %v452
      %v454 = vmul.f32 %v449, %v453
      %455 = vrot.lane.b32.xlu0 %v193, 56
      %v456 = vpop.permute.xlu0 %455
      %v459 = vsel %vm214, %v454, 0
      %461 = vmatpush.msra.mxu0 0.0
      %462 = vmatpush.msra.mxu0 0.0
      %463 = vmatpush.msra.mxu0 0.0
      %464 = vmatpush.msra.mxu0 0.0
      %465 = vmatpush.msra.mxu0 0.0
      %466 = vmatpush.msra.mxu0 0.0
      %467 = vmatpush.msra.mxu0 0.0
      %468 = vmatpush.msra.mxu0 0.0
      %469 = vmatpush.msra.mxu0 0.0
      %470 = vmatpush.msra.mxu0 0.0
      %471 = vmatpush.msra.mxu0 0.0
      %472 = vmatpush.msra.mxu0 0.0
      %473 = vmatpush.msra.mxu0 0.0
      %474 = vmatpush.msra.mxu0 0.0
      %475 = vmatpush.msra.mxu0 0.0
      %476 = vmatpush.msra.mxu0 %v456
      %477 = vmatmul.f32.gmra.mxu0 %v459
      %v478 = vpop.f32.mrf.mxu0
      %v479 = vadd.f32 0.0, %v478
      %480 = vdwg.mxu0
      %481 = vrot.lane.b32.xlu0 %v213, 112
      %v482 = vpop.permute.xlu0 %481
      %483 = vrot.lane.b32.xlu0 %v194, 112
      %v484 = vpop.permute.xlu0 %483
      %485 = vrot.lane.b32.xlu0 %v195, 112
      %v486 = vpop.permute.xlu0 %485
      %v487 = vsel %vm214, %v482, 0
      %v489 = vsel %vm214, %v484, 0
      %v491 = vsel %vm214, %v486, 0
      %493 = vmatpush.xpose.msra.mxu0 0.0
      %494 = vmatpush.xpose.msra.mxu0 0.0
      %495 = vmatpush.xpose.msra.mxu0 0.0
      %496 = vmatpush.xpose.msra.mxu0 0.0
      %497 = vmatpush.xpose.msra.mxu0 0.0
      %498 = vmatpush.xpose.msra.mxu0 0.0
      %499 = vmatpush.xpose.msra.mxu0 0.0
      %500 = vmatpush.xpose.msra.mxu0 0.0
      %501 = vmatpush.xpose.msra.mxu0 0.0
      %502 = vmatpush.xpose.msra.mxu0 0.0
      %503 = vmatpush.xpose.msra.mxu0 0.0
      %504 = vmatpush.xpose.msra.mxu0 0.0
      %505 = vmatpush.xpose.msra.mxu0 0.0
      %506 = vmatpush.xpose.msra.mxu0 0.0
      %507 = vmatpush.xpose.msra.mxu0 %v491
      %508 = vmatpush.xpose.msra.mxu0 %v489
      %509 = vmatmul.f32.gmra.mxu0 %v487
      %v510 = vpop.f32.mrf.mxu0
      %v511 = vadd.f32 0.0, %v510
      %512 = vdwg.mxu0
      %514 = vrot.lane.b32.xlu0 %v511, 1
      %v515 = vpop.permute.xlu0 %514
      %517 = vrot.lane.b32.xlu0 %v511, 2
      %v518 = vpop.permute.xlu0 %517
      %520 = vrot.lane.b32.xlu0 %v511, 3
      %v521 = vpop.permute.xlu0 %520
      %523 = vrot.lane.b32.xlu0 %v511, 4
      %v524 = vpop.permute.xlu0 %523
      %526 = vrot.lane.b32.xlu0 %v511, 5
      %v527 = vpop.permute.xlu0 %526
      %529 = vrot.lane.b32.xlu0 %v511, 6
      %v530 = vpop.permute.xlu0 %529
      %532 = vrot.lane.b32.xlu0 %v511, 7
      %v533 = vpop.permute.xlu0 %532
      %v535 = vsel %vm266, %v511, %v515
      %v536 = vsel %vm268, %v535, %v518
      %v537 = vsel %vm270, %v536, %v521
      %v538 = vsel %vm272, %v537, %v524
      %v539 = vsel %vm274, %v538, %v527
      %v540 = vsel %vm276, %v539, %v530
      %v541 = vsel %vm278, %v540, %v533
      %543 = vrot.lane.b32.xlu0 %v541, 121
      %v544 = vpop.permute.xlu0 %543
      %v546 = vmul.f32 %v205, %v544
      %547 = vrot.lane.b32.xlu0 %v209, 112
      %v548 = vpop.permute.xlu0 %547
      %549 = vrot.lane.b32.xlu0 %v193, 80
      %v550 = vpop.permute.xlu0 %549
      %v551 = vsel %vm214, %v548, 0
      %v553 = vsel %vm214, %v550, 0
      %555 = vmatpush.xpose.msra.mxu0 0.0
      %556 = vmatpush.xpose.msra.mxu0 0.0
      %557 = vmatpush.xpose.msra.mxu0 0.0
      %558 = vmatpush.xpose.msra.mxu0 0.0
      %559 = vmatpush.xpose.msra.mxu0 0.0
      %560 = vmatpush.xpose.msra.mxu0 0.0
      %561 = vmatpush.xpose.msra.mxu0 0.0
      %562 = vmatpush.xpose.msra.mxu0 0.0
      %563 = vmatpush.xpose.msra.mxu0 0.0
      %564 = vmatpush.xpose.msra.mxu0 0.0
      %565 = vmatpush.xpose.msra.mxu0 0.0
      %566 = vmatpush.xpose.msra.mxu0 0.0
      %567 = vmatpush.xpose.msra.mxu0 0.0
      %568 = vmatpush.xpose.msra.mxu0 0.0
      %569 = vmatpush.xpose.msra.mxu0 0.0
      %570 = vmatpush.xpose.msra.mxu0 %v553
      %571 = vmatmul.f32.gmra.mxu0 %v551
      %v572 = vpop.f32.mrf.mxu0
      %v573 = vadd.f32 %v546, %v572
      %574 = vdwg.mxu0
      %v575 = vsel %vm214, %v573, -inf
      %576 = vmax.xlane.f32.xlu0 %v575
      %v577 = vpop.xlane.xlu0 %576
      %v578 = vsub.f32 %v573, %v577
      %v579 = vmul.f32 %v578, 1.442695
      %v580 = vpow.pop %v579
      %v581 = vsel %vm214, %v580, 0.0
      %582 = vadd.xlane.f32.xlu0 %v581
      %v583 = vpop.xlane.xlu0 %582
      %v584 = vrcp.pop %v583
      %v585 = vmul.f32 %v580, %v584
      %586 = vrot.lane.b32.xlu0 %v193, 48
      %v587 = vpop.permute.xlu0 %586
      %v590 = vsel %vm214, %v585, 0
      %592 = vmatpush.msra.mxu0 0.0
      %593 = vmatpush.msra.mxu0 0.0
      %594 = vmatpush.msra.mxu0 0.0
      %595 = vmatpush.msra.mxu0 0.0
      %596 = vmatpush.msra.mxu0 0.0
      %597 = vmatpush.msra.mxu0 0.0
      %598 = vmatpush.msra.mxu0 0.0
      %599 = vmatpush.msra.mxu0 0.0
      %600 = vmatpush.msra.mxu0 0.0
      %601 = vmatpush.msra.mxu0 0.0
      %602 = vmatpush.msra.mxu0 0.0
      %603 = vmatpush.msra.mxu0 0.0
      %604 = vmatpush.msra.mxu0 0.0
      %605 = vmatpush.msra.mxu0 0.0
      %606 = vmatpush.msra.mxu0 0.0
      %607 = vmatpush.msra.mxu0 %v587
      %608 = vmatmul.f32.gmra.mxu0 %v590
      %v609 = vpop.f32.mrf.mxu0
      %v610 = vadd.f32 0.0, %v609
      %611 = vdwg.mxu0
      %612 = vrot.lane.b32.xlu0 %v213, 104
      %v613 = vpop.permute.xlu0 %612
      %614 = vrot.lane.b32.xlu0 %v194, 104
      %v615 = vpop.permute.xlu0 %614
      %616 = vrot.lane.b32.xlu0 %v195, 104
      %v617 = vpop.permute.xlu0 %616
      %v618 = vsel %vm214, %v613, 0
      %v620 = vsel %vm214, %v615, 0
      %v622 = vsel %vm214, %v617, 0
      %624 = vmatpush.xpose.msra.mxu0 0.0
      %625 = vmatpush.xpose.msra.mxu0 0.0
      %626 = vmatpush.xpose.msra.mxu0 0.0
      %627 = vmatpush.xpose.msra.mxu0 0.0
      %628 = vmatpush.xpose.msra.mxu0 0.0
      %629 = vmatpush.xpose.msra.mxu0 0.0
      %630 = vmatpush.xpose.msra.mxu0 0.0
      %631 = vmatpush.xpose.msra.mxu0 0.0
      %632 = vmatpush.xpose.msra.mxu0 0.0
      %633 = vmatpush.xpose.msra.mxu0 0.0
      %634 = vmatpush.xpose.msra.mxu0 0.0
      %635 = vmatpush.xpose.msra.mxu0 0.0
      %636 = vmatpush.xpose.msra.mxu0 0.0
      %637 = vmatpush.xpose.msra.mxu0 0.0
      %638 = vmatpush.xpose.msra.mxu0 %v622
      %639 = vmatpush.xpose.msra.mxu0 %v620
      %640 = vmatmul.f32.gmra.mxu0 %v618
      %v641 = vpop.f32.mrf.mxu0
      %v642 = vadd.f32 0.0, %v641
      %643 = vdwg.mxu0
      %645 = vrot.lane.b32.xlu0 %v642, 1
      %v646 = vpop.permute.xlu0 %645
      %648 = vrot.lane.b32.xlu0 %v642, 2
      %v649 = vpop.permute.xlu0 %648
      %651 = vrot.lane.b32.xlu0 %v642, 3
      %v652 = vpop.permute.xlu0 %651
      %654 = vrot.lane.b32.xlu0 %v642, 4
      %v655 = vpop.permute.xlu0 %654
      %657 = vrot.lane.b32.xlu0 %v642, 5
      %v658 = vpop.permute.xlu0 %657
      %660 = vrot.lane.b32.xlu0 %v642, 6
      %v661 = vpop.permute.xlu0 %660
      %663 = vrot.lane.b32.xlu0 %v642, 7
      %v664 = vpop.permute.xlu0 %663
      %v666 = vsel %vm266, %v642, %v646
      %v667 = vsel %vm268, %v666, %v649
      %v668 = vsel %vm270, %v667, %v652
      %v669 = vsel %vm272, %v668, %v655
      %v670 = vsel %vm274, %v669, %v658
      %v671 = vsel %vm276, %v670, %v661
      %v672 = vsel %vm278, %v671, %v664
      %674 = vrot.lane.b32.xlu0 %v672, 121
      %v675 = vpop.permute.xlu0 %674
      %v677 = vmul.f32 %v205, %v675
      %678 = vrot.lane.b32.xlu0 %v209, 104
      %v679 = vpop.permute.xlu0 %678
      %680 = vrot.lane.b32.xlu0 %v193, 72
      %v681 = vpop.permute.xlu0 %680
      %v682 = vsel %vm214, %v679, 0
      %v684 = vsel %vm214, %v681, 0
      %686 = vmatpush.xpose.msra.mxu0 0.0
      %687 = vmatpush.xpose.msra.mxu0 0.0
      %688 = vmatpush.xpose.msra.mxu0 0.0
      %689 = vmatpush.xpose.msra.mxu0 0.0
      %690 = vmatpush.xpose.msra.mxu0 0.0
      %691 = vmatpush.xpose.msra.mxu0 0.0
      %692 = vmatpush.xpose.msra.mxu0 0.0
      %693 = vmatpush.xpose.msra.mxu0 0.0
      %694 = vmatpush.xpose.msra.mxu0 0.0
      %695 = vmatpush.xpose.msra.mxu0 0.0
      %696 = vmatpush.xpose.msra.mxu0 0.0
      %697 = vmatpush.xpose.msra.mxu0 0.0
      %698 = vmatpush.xpose.msra.mxu0 0.0
      %699 = vmatpush.xpose.msra.mxu0 0.0
      %700 = vmatpush.xpose.msra.mxu0 0.0
      %701 = vmatpush.xpose.msra.mxu0 %v684
      %702 = vmatmul.f32.gmra.mxu0 %v682
      %v703 = vpop.f32.mrf.mxu0
      %v704 = vadd.f32 %v677, %v703
      %705 = vdwg.mxu0
      %v706 = vsel %vm214, %v704, -inf
      %707 = vmax.xlane.f32.xlu0 %v706
      %v708 = vpop.xlane.xlu0 %707
      %v709 = vsub.f32 %v704, %v708
      %v710 = vmul.f32 %v709, 1.442695
      %v711 = vpow.pop %v710
      %v712 = vsel %vm214, %v711, 0.0
      %713 = vadd.xlane.f32.xlu0 %v712
      %v714 = vpop.xlane.xlu0 %713
      %v715 = vrcp.pop %v714
      %v716 = vmul.f32 %v711, %v715
      %717 = vrot.lane.b32.xlu0 %v193, 40
      %v718 = vpop.permute.xlu0 %717
      %v721 = vsel %vm214, %v716, 0
      %723 = vmatpush.msra.mxu0 0.0
      %724 = vmatpush.msra.mxu0 0.0
      %725 = vmatpush.msra.mxu0 0.0
      %726 = vmatpush.msra.mxu0 0.0
      %727 = vmatpush.msra.mxu0 0.0
      %728 = vmatpush.msra.mxu0 0.0
      %729 = vmatpush.msra.mxu0 0.0
      %730 = vmatpush.msra.mxu0 0.0
      %731 = vmatpush.msra.mxu0 0.0
      %732 = vmatpush.msra.mxu0 0.0
      %733 = vmatpush.msra.mxu0 0.0
      %734 = vmatpush.msra.mxu0 0.0
      %735 = vmatpush.msra.mxu0 0.0
      %736 = vmatpush.msra.mxu0 0.0
      %737 = vmatpush.msra.mxu0 0.0
      %738 = vmatpush.msra.mxu0 %v718
      %739 = vmatmul.f32.gmra.mxu0 %v721
      %v740 = vpop.f32.mrf.mxu0
      %v741 = vadd.f32 0.0, %v740
      %742 = vdwg.mxu0
      %744 = vrot.lane.b32.xlu0 %v479, 8
      %v745 = vpop.permute.xlu0 %744
      %748 = vrot.lane.b32.xlu0 %v610, 16
      %v749 = vpop.permute.xlu0 %748
      %752 = vrot.lane.b32.xlu0 %v741, 24
      %v753 = vpop.permute.xlu0 %752
      %v755 = vsel %vm214, %v348, %v745
      %vm756 = vcmask 130048
      %v757 = vsel %vm756, %v755, %v749
      %vm758 = vcmask 195584
      %v759 = vsel %vm758, %v757, %v753
      %vm760 = vcmask 261120
      %761 = vst.msk [vmem:[%s192] sm:$0xff] %vm760, %v759
      %p762 = scmp.lt.s32.totalorder %s15, 1
      %s763 = scalar_select %p762, %s15, 1
      %s764 = smul.addr %s763, 8
      %s765 = scalar_lea.vmem %s4, %s764
      // Predicated region
      $region37: #{relative_encoder_block.7} parent=35 // pred_check
        %p766 = pneg %p122
      $region38: #{relative_encoder_block.7} parent=35 // pred_check_branch
        %768 = sbr.rel (%p766) target = $region40
      $region39: #{relative_encoder_block.7} parent=35 // pred_region
        _
      $region40: #{relative_encoder_block.7} parent=35 // pred_fallthru
        _
    $region36: #{relative_encoder_block.7} parent=5 // pred_fallthru
      _
    %p769 = scmp.le.s32.totalorder 2, %s10
    // Predicated region
    $region41: #{relative_encoder_block.7} parent=5 // pred_check
      %p770 = pneg %p769
    $region42: #{relative_encoder_block.7} parent=5 // pred_check_branch
      %772 = sbr.rel (%p770) target = $region44
    $region43: #{relative_encoder_block.7} parent=5 // pred_region
      %s773 = ssub.s32 %s10, 2
      // Predicated region
      $region45: #{relative_encoder_block.7} parent=43 // pred_check
        %p774 = pneg %p128
      $region46: #{relative_encoder_block.7} parent=43 // pred_check_branch
        %776 = sbr.rel (%p774) target = $region48
      $region47: #{relative_encoder_block.7} parent=43 // pred_region
        %p777 = scmp.lt.s32.totalorder %s16, 1
        %s778 = scalar_select %p777, %s16, 1
        %s779 = smul.addr %s778, 8
        %s780 = scalar_lea.vmem %s4, %s779
      $region48: #{relative_encoder_block.7} parent=43 // pred_fallthru
        _
    $region44: #{relative_encoder_block.7} parent=5 // pred_fallthru
      _
  $region6: #{relative_encoder_block.7} parent=0 // loop_footer
    %s14 = sadd.s32 1, %s10
  $region7: #{relative_encoder_block.7} parent=0 // loop_footer_branch
    %9 = sbr.rel target = $region3
  $region8: #{relative_encoder_block.7} parent=0 // loop_exit
    _

// kernel: relative_encoder_block.9
$region0: #{relative_encoder_block.9}
  #allocation0 [shape = 'u32[]', space=smem, size = 0x4, offset = 0x4, fixed_abs, tag = 'smem constant byte address 0x4 - core index']
  #allocation1 [shape = 'u32[72,128]{1,0:T(1,128)}', space=vmem, size = 0x9000, scoped, tag = 'internal scratch']
  %s0 = inlined_call_operand.vmem [shape: f32[16,32], index: 0, kind: input, shape index: {}]
  %s1 = inlined_call_operand.vmem [shape: f32[32,64], index: 1, kind: input, shape index: {}]
  %s2 = inlined_call_operand.vmem [shape: f32[1,64], index: 2, kind: input, shape index: {}]
  %s3 = inlined_call_operand.vmem [shape: f32[64,32], index: 3, kind: input, shape index: {}]
  %s4 = inlined_call_operand.vmem [shape: f32[1,32], index: 4, kind: input, shape index: {}]
  %s5 = inlined_call_operand.vmem [shape: f32[1,32], index: 5, kind: input, shape index: {}]
  %s6 = inlined_call_operand.vmem [shape: f32[1,32], index: 6, kind: input, shape index: {}]
  %s7 = inlined_call_operand.hbm [shape: f32[16,32], index: 7, kind: output, shape index: {}]
  %s8 = sld [smem:[#allocation0]]
  $region61: #{relative_encoder_block.9} parent=0
    _
  %s10 = ssub.s32 1, %s8
  %s11 = scalar_select 0, %s10, %s8
  $region1: #{relative_encoder_block.9} parent=0
    #allocation2 [shape = 'u8[8192]{0}', space=vmem, size = 0x2000, scoped, tag = 'output window, operand 0']
    #allocation3 [shape = 's32[2]{0}', space=sflag, size = 0x8, scoped, tag = 'scoped memory for relative_encoder_block.9']
    %12 = vsyncpa [#allocation3], 0
    %s13 = scalar_lea.sflag [#allocation3], 1
    %14 = vsyncpa %s13, 0
    loop: start=0, step=1, limit=4
    $region2: #{relative_encoder_block.9} parent=1 // loop_pre_header
      _
    $region3: #{relative_encoder_block.9} parent=1 // loop_header
      %s16 = sphi 0, %s20
      %p17 = scmp.ge.s32.totalorder %s16, 4
      %s26 = sphi 0, %s28
      %s29 = sphi 0, %s26
      %s30 = sphi 0, %s29
      %s46 = sphi 0, %s30
      %s50 = sphi 0, %s50
      %s52 = sphi 0, %s50
      %s53 = sphi 0, %s52
      %s67 = sphi 0, %s53
      %s71 = sphi 0, %s71
      %s73 = sphi 0, %s71
      %s74 = sphi 0, %s73
      %s88 = sphi 0, %s74
      %s92 = sphi 0, %s92
      %s94 = sphi 0, %s92
      %s95 = sphi 0, %s94
      %s109 = sphi 0, %s95
      %s113 = sphi 0, %s113
      %s115 = sphi 0, %s113
      %s116 = sphi 0, %s115
      %s130 = sphi 0, %s116
      %s134 = sphi 0, %s134
      %s136 = sphi 0, %s134
      %s137 = sphi 0, %s136
      %s151 = sphi 0, %s137
      %s155 = sphi 0, %s155
      %s157 = sphi 0, %s155
      %s158 = sphi 0, %s157
      %s172 = sphi 0, %s158
      %s178 = sphi 0, %s180
      %s181 = sphi 0, %s178
      %s182 = sphi 0, %s181
      %s198 = sphi 0, %s182
    $region4: #{relative_encoder_block.9} parent=1 // loop_header_branch
      %19 = sbr.rel (%p17) target = $region8
    $region5: #{relative_encoder_block.9} parent=1 // loop_body
      %s21 = ssub.s32 %s16, 1
      %s22 = ssub.s32 %s16, 2
      %s23 = sadd.s32 %s16, 1
      %s24 = ssub.s32 %s16, %s23
      %p25 = scmp.eq.s32.totalorder %s24, 0
      %s27 = sadd.s32 %s26, 1
      %s28 = scalar_select %p25, %s26, %s27
      %p31 = pneg %p25
      %p32 = scmp.eq.s32.totalorder %s16, 1
      %p33 = por %p31, %p32
      %p34 = scmp.ne.s32.totalorder %s26, %s29
      %p35 = scmp.eq.s32.totalorder %s16, 0
      %p36 = por %p34, %p35
      %p37 = scmp.ne.s32.totalorder %s26, %s29
      %p38 = scmp.eq.s32.totalorder %s21, 1
      %p39 = por %p37, %p38
      %p40 = scmp.ne.s32.totalorder %s29, %s30
      %p41 = scmp.eq.s32.totalorder %s21, 0
      %p42 = por %p40, %p41
      %p43 = scmp.ne.s32.totalorder %s29, %s30
      %p44 = scmp.eq.s32.totalorder %s22, 1
      %p45 = por %p43, %p44
      %p47 = scmp.ne.s32.totalorder %s30, %s46
      %p48 = scmp.eq.s32.totalorder %s22, 0
      %p49 = por %p47, %p48
      %s51 = sadd.s32 %s50, 1
      %p54 = scmp.eq.s32.totalorder %s16, 1
      %p55 = scmp.ne.s32.totalorder %s50, %s52
      %p56 = scmp.eq.s32.totalorder %s16, 0
      %p57 = por %p55, %p56
      %p58 = scmp.ne.s32.totalorder %s50, %s52
      %p59 = scmp.eq.s32.totalorder %s21, 1
      %p60 = por %p58, %p59
      %p61 = scmp.ne.s32.totalorder %s52, %s53
      %p62 = scmp.eq.s32.totalorder %s21, 0
      %p63 = por %p61, %p62
      %p64 = scmp.ne.s32.totalorder %s52, %s53
      %p65 = scmp.eq.s32.totalorder %s22, 1
      %p66 = por %p64, %p65
      %p68 = scmp.ne.s32.totalorder %s53, %s67
      %p69 = scmp.eq.s32.totalorder %s22, 0
      %p70 = por %p68, %p69
      %s72 = sadd.s32 %s71, 1
      %p75 = scmp.eq.s32.totalorder %s16, 1
      %p76 = scmp.ne.s32.totalorder %s71, %s73
      %p77 = scmp.eq.s32.totalorder %s16, 0
      %p78 = por %p76, %p77
      %p79 = scmp.ne.s32.totalorder %s71, %s73
      %p80 = scmp.eq.s32.totalorder %s21, 1
      %p81 = por %p79, %p80
      %p82 = scmp.ne.s32.totalorder %s73, %s74
      %p83 = scmp.eq.s32.totalorder %s21, 0
      %p84 = por %p82, %p83
      %p85 = scmp.ne.s32.totalorder %s73, %s74
      %p86 = scmp.eq.s32.totalorder %s22, 1
      %p87 = por %p85, %p86
      %p89 = scmp.ne.s32.totalorder %s74, %s88
      %p90 = scmp.eq.s32.totalorder %s22, 0
      %p91 = por %p89, %p90
      %s93 = sadd.s32 %s92, 1
      %p96 = scmp.eq.s32.totalorder %s16, 1
      %p97 = scmp.ne.s32.totalorder %s92, %s94
      %p98 = scmp.eq.s32.totalorder %s16, 0
      %p99 = por %p97, %p98
      %p100 = scmp.ne.s32.totalorder %s92, %s94
      %p101 = scmp.eq.s32.totalorder %s21, 1
      %p102 = por %p100, %p101
      %p103 = scmp.ne.s32.totalorder %s94, %s95
      %p104 = scmp.eq.s32.totalorder %s21, 0
      %p105 = por %p103, %p104
      %p106 = scmp.ne.s32.totalorder %s94, %s95
      %p107 = scmp.eq.s32.totalorder %s22, 1
      %p108 = por %p106, %p107
      %p110 = scmp.ne.s32.totalorder %s95, %s109
      %p111 = scmp.eq.s32.totalorder %s22, 0
      %p112 = por %p110, %p111
      %s114 = sadd.s32 %s113, 1
      %p117 = scmp.eq.s32.totalorder %s16, 1
      %p118 = scmp.ne.s32.totalorder %s113, %s115
      %p119 = scmp.eq.s32.totalorder %s16, 0
      %p120 = por %p118, %p119
      %p121 = scmp.ne.s32.totalorder %s113, %s115
      %p122 = scmp.eq.s32.totalorder %s21, 1
      %p123 = por %p121, %p122
      %p124 = scmp.ne.s32.totalorder %s115, %s116
      %p125 = scmp.eq.s32.totalorder %s21, 0
      %p126 = por %p124, %p125
      %p127 = scmp.ne.s32.totalorder %s115, %s116
      %p128 = scmp.eq.s32.totalorder %s22, 1
      %p129 = por %p127, %p128
      %p131 = scmp.ne.s32.totalorder %s116, %s130
      %p132 = scmp.eq.s32.totalorder %s22, 0
      %p133 = por %p131, %p132
      %s135 = sadd.s32 %s134, 1
      %p138 = scmp.eq.s32.totalorder %s16, 1
      %p139 = scmp.ne.s32.totalorder %s134, %s136
      %p140 = scmp.eq.s32.totalorder %s16, 0
      %p141 = por %p139, %p140
      %p142 = scmp.ne.s32.totalorder %s134, %s136
      %p143 = scmp.eq.s32.totalorder %s21, 1
      %p144 = por %p142, %p143
      %p145 = scmp.ne.s32.totalorder %s136, %s137
      %p146 = scmp.eq.s32.totalorder %s21, 0
      %p147 = por %p145, %p146
      %p148 = scmp.ne.s32.totalorder %s136, %s137
      %p149 = scmp.eq.s32.totalorder %s22, 1
      %p150 = por %p148, %p149
      %p152 = scmp.ne.s32.totalorder %s137, %s151
      %p153 = scmp.eq.s32.totalorder %s22, 0
      %p154 = por %p152, %p153
      %s156 = sadd.s32 %s155, 1
      %p159 = scmp.eq.s32.totalorder %s16, 1
      %p160 = scmp.ne.s32.totalorder %s155, %s157
      %p161 = scmp.eq.s32.totalorder %s16, 0
      %p162 = por %p160, %p161
      %p163 = scmp.ne.s32.totalorder %s155, %s157
      %p164 = scmp.eq.s32.totalorder %s21, 1
      %p165 = por %p163, %p164
      %p166 = scmp.ne.s32.totalorder %s157, %s158
      %p167 = scmp.eq.s32.totalorder %s21, 0
      %p168 = por %p166, %p167
      %p169 = scmp.ne.s32.totalorder %s157, %s158
      %p170 = scmp.eq.s32.totalorder %s22, 1
      %p171 = por %p169, %p170
      %p173 = scmp.ne.s32.totalorder %s158, %s172
      %p174 = scmp.eq.s32.totalorder %s22, 0
      %p175 = por %p173, %p174
      %s176 = ssub.s32 %s16, %s23
      %p177 = scmp.eq.s32.totalorder %s176, 0
      %s179 = sadd.s32 %s178, 1
      %s180 = scalar_select %p177, %s178, %s179
      %p183 = pneg %p177
      %p184 = scmp.eq.s32.totalorder %s16, 1
      %p185 = por %p183, %p184
      %p186 = scmp.ne.s32.totalorder %s178, %s181
      %p187 = scmp.eq.s32.totalorder %s16, 0
      %p188 = por %p186, %p187
      %p189 = scmp.ne.s32.totalorder %s178, %s181
      %p190 = scmp.eq.s32.totalorder %s21, 1
      %p191 = por %p189, %p190
      %p192 = scmp.ne.s32.totalorder %s181, %s182
      %p193 = scmp.eq.s32.totalorder %s21, 0
      %p194 = por %p192, %p193
      %p195 = scmp.ne.s32.totalorder %s181, %s182
      %p196 = scmp.eq.s32.totalorder %s22, 1
      %p197 = por %p195, %p196
      %p199 = scmp.ne.s32.totalorder %s182, %s198
      %p200 = scmp.eq.s32.totalorder %s22, 0
      %p201 = por %p199, %p200
      %p202 = scmp.le.s32.totalorder 1, %s16
      %p203 = scmp.lt.s32.totalorder %s16, 3
      %p204 = pnand %p202, %p203
      %p205 = pneg %p204
      // Predicated region
      $region9: #{relative_encoder_block.9} parent=5 // pred_check
        _
      $region10: #{relative_encoder_block.9} parent=5 // pred_check_branch
        %207 = sbr.rel (%p204) target = $region12
      $region11: #{relative_encoder_block.9} parent=5 // pred_region
        %s208 = ssub.s32 %s16, 1
        // Predicated region
        $region13: #{relative_encoder_block.9} parent=11 // pred_check
          %p209 = pneg %p63
        $region14: #{relative_encoder_block.9} parent=11 // pred_check_branch
          %211 = sbr.rel (%p209) target = $region16
        $region15: #{relative_encoder_block.9} parent=11 // pred_region
          _
        $region16: #{relative_encoder_block.9} parent=11 // pred_fallthru
          _
        // Predicated region
        $region17: #{relative_encoder_block.9} parent=11 // pred_check
          %p212 = pneg %p84
        $region18: #{relative_encoder_block.9} parent=11 // pred_check_branch
          %214 = sbr.rel (%p212) target = $region20
        $region19: #{relative_encoder_block.9} parent=11 // pred_region
          _
        $region20: #{relative_encoder_block.9} parent=11 // pred_fallthru
          _
        // Predicated region
        $region21: #{relative_encoder_block.9} parent=11 // pred_check
          %p215 = pneg %p105
        $region22: #{relative_encoder_block.9} parent=11 // pred_check_branch
          %217 = sbr.rel (%p215) target = $region24
        $region23: #{relative_encoder_block.9} parent=11 // pred_region
          _
        $region24: #{relative_encoder_block.9} parent=11 // pred_fallthru
          _
        // Predicated region
        $region25: #{relative_encoder_block.9} parent=11 // pred_check
          %p218 = pneg %p126
        $region26: #{relative_encoder_block.9} parent=11 // pred_check_branch
          %220 = sbr.rel (%p218) target = $region28
        $region27: #{relative_encoder_block.9} parent=11 // pred_region
          _
        $region28: #{relative_encoder_block.9} parent=11 // pred_fallthru
          _
        // Predicated region
        $region29: #{relative_encoder_block.9} parent=11 // pred_check
          %p221 = pneg %p147
        $region30: #{relative_encoder_block.9} parent=11 // pred_check_branch
          %223 = sbr.rel (%p221) target = $region32
        $region31: #{relative_encoder_block.9} parent=11 // pred_region
          _
        $region32: #{relative_encoder_block.9} parent=11 // pred_fallthru
          _
        // Predicated region
        $region33: #{relative_encoder_block.9} parent=11 // pred_check
          %p224 = pneg %p168
        $region34: #{relative_encoder_block.9} parent=11 // pred_check_branch
          %226 = sbr.rel (%p224) target = $region36
        $region35: #{relative_encoder_block.9} parent=11 // pred_region
          _
        $region36: #{relative_encoder_block.9} parent=11 // pred_fallthru
          _
      $region12: #{relative_encoder_block.9} parent=5 // pred_fallthru
        _
      %p227 = scmp.lt.s32.totalorder %s16, 2
      // Predicated region
      $region37: #{relative_encoder_block.9} parent=5 // pred_check
        %p228 = pneg %p227
      $region38: #{relative_encoder_block.9} parent=5 // pred_check_branch
        %230 = sbr.rel (%p228) target = $region40
      $region39: #{relative_encoder_block.9} parent=5 // pred_region
        // Predicated region
        $region41: #{relative_encoder_block.9} parent=39 // pred_check
          %p231 = pneg %p36
        $region42: #{relative_encoder_block.9} parent=39 // pred_check_branch
          %233 = sbr.rel (%p231) target = $region44
        $region43: #{relative_encoder_block.9} parent=39 // pred_region
          %p234 = scmp.lt.s32.totalorder %s16, 1
          %s235 = scalar_select %p234, %s16, 1
          %s236 = smul.addr %s235, 8
          %s237 = scalar_lea.vmem %s0, %s236
        $region44: #{relative_encoder_block.9} parent=39 // pred_fallthru
          _
      $region40: #{relative_encoder_block.9} parent=5 // pred_fallthru
        _
      %p238 = scmp.le.s32.totalorder 1, %s16
      %p239 = scmp.lt.s32.totalorder %s16, 3
      %p240 = pnand %p238, %p239
      %p241 = pneg %p240
      // Predicated region
      $region45: #{relative_encoder_block.9} parent=5 // pred_check
        _
      $region46: #{relative_encoder_block.9} parent=5 // pred_check_branch
        %243 = sbr.rel (%p240) target = $region48
      $region47: #{relative_encoder_block.9} parent=5 // pred_region
        %s244 = ssub.s32 %s16, 1
        %p245 = scmp.lt.s32.totalorder %s21, 1
        %s246 = scalar_select %p245, %s21, 1
        %s247 = smul.addr %s246, 8
        %s248 = scalar_lea.vmem %s0, %s247
        %p249 = pneg %p42
        %p250 = pneg %p39
        %p251 = pneg %p63
        %p252 = pneg %p60
        %p253 = pneg %p84
        %p254 = pneg %p81
        %p255 = pneg %p105
        %p256 = pneg %p102
        %p257 = pneg %p126
        %p258 = pneg %p123
        %p259 = pneg %p147
        %p260 = pneg %p144
        %p261 = pneg %p168
        %p262 = pneg %p165
        %p263 = pneg %p194
        %p264 = pneg %p191
        %s265 = sand.u32 %s181, 1
        %s266 = scalar_lea.sflag [#allocation3], %s265
        %s267 = sand.u32 %s181, 1
        %s268 = smul.addr %s267, 8
        %s269 = scalar_lea.vmem [#allocation2], %s268
        %p270 = scmp.lt.s32.totalorder %s21, 1
        %s271 = scalar_select %p270, %s21, 1
        %s272 = smul.addr %s271, 8
        %s273 = scalar_lea.vmem %s0, %s272
        %v274 = vld [vmem:[%s273] sm:$0xff]
        %v275 = vld [vmem:[%s1] sm:$0xff]
        %v276 = vld [vmem:[%s1 + $0x8] sm:$0xff]
        %v277 = vld [vmem:[%s1 + $0x10] sm:$0xff]
        %v278 = vld [vmem:[%s1 + $0x18] sm:$0xff]
        %v279 = vld [vmem:[%s2] sm:$0x1]
        %v281 = vperm.slane %v279, 0
        %vm283 = vcmask 261120
        %v285 = vsel %vm283, %v274, 0
        %287 = vmatpush.msra.mxu0 0.0
        %288 = vmatpush.msra.mxu0 0.0
        %289 = vmatpush.msra.mxu0 0.0
        %290 = vmatpush.msra.mxu0 0.0
        %291 = vmatpush.msra.mxu0 0.0
        %292 = vmatpush.msra.mxu0 0.0
        %293 = vmatpush.msra.mxu0 0.0
        %294 = vmatpush.msra.mxu0 0.0
        %295 = vmatpush.msra.mxu0 0.0
        %296 = vmatpush.msra.mxu0 0.0
        %297 = vmatpush.msra.mxu0 0.0
        %298 = vmatpush.msra.mxu0 0.0
        %299 = vmatpush.msra.mxu0 %v278
        %300 = vmatpush.msra.mxu0 %v277
        %301 = vmatpush.msra.mxu0 %v276
        %302 = vmatpush.msra.mxu0 %v275
        %303 = vmatmul.f32.gmra.mxu0 %v285
        %v304 = vpop.f32.mrf.mxu0
        %v305 = vadd.f32 %v281, %v304
        %306 = vdwg.mxu0
        %v307 = vmax.f32 %v305, 0.0
        %v308 = vld [vmem:[%s3] sm:$0xff]
        %v309 = vld [vmem:[%s3 + $0x8] sm:$0xff]
        %v310 = vld [vmem:[%s3 + $0x10] sm:$0xff]
        %v311 = vld [vmem:[%s3 + $0x18] sm:$0xff]
        %v312 = vld [vmem:[%s3 + $0x20] sm:$0xff]
        %v313 = vld [vmem:[%s3 + $0x28] sm:$0xff]
        %v314 = vld [vmem:[%s3 + $0x30] sm:$0xff]
        %v315 = vld [vmem:[%s3 + $0x38] sm:$0xff]
        %vm316 = vcmask 523264
        %v318 = vsel %vm316, %v307, 0
        %320 = vmatpush.msra.mxu0 0.0
        %321 = vmatpush.msra.mxu0 0.0
        %322 = vmatpush.msra.mxu0 0.0
        %323 = vmatpush.msra.mxu0 0.0
        %324 = vmatpush.msra.mxu0 0.0
        %325 = vmatpush.msra.mxu0 0.0
        %326 = vmatpush.msra.mxu0 0.0
        %327 = vmatpush.msra.mxu0 0.0
        %328 = vmatpush.msra.mxu0 %v315
        %329 = vmatpush.msra.mxu0 %v314
        %330 = vmatpush.msra.mxu0 %v313
        %331 = vmatpush.msra.mxu0 %v312
        %332 = vmatpush.msra.mxu0 %v311
        %333 = vmatpush.msra.mxu0 %v310
        %334 = vmatpush.msra.mxu0 %v309
        %335 = vmatpush.msra.mxu0 %v308
        %336 = vmatmul.f32.gmra.mxu0 %v318
        %v337 = vpop.f32.mrf.mxu0
        %v338 = vadd.f32 0.0, %v337
        %339 = vdwg.mxu0
        %v340 = vadd.f32 %v274, %v338
        %v341 = vld [vmem:[%s4] sm:$0x1]
        %v343 = vperm.slane %v341, 0
        %v345 = vadd.f32 %v340, %v343
        %v346 = vsel %vm283, %v345, 0.0
        %347 = vadd.xlane.f32.xlu0 %v346
        %v348 = vpop.xlane.xlu0 %347
        %v349 = vrcp.pop 32.0
        %v350 = vmul.f32 32.0, %v349
        %v351 = vsub.f32 1.0, %v350
        %v352 = vmul.f32 %v349, %v351
        %v353 = vadd.f32 %v349, %v352
        %vm354 = vweird.f32 %v349
        %v355 = vsel %vm354, %v349, %v353
        %v356 = vmul.f32 %v348, %v355
        %v357 = vsub.f32 %v345, %v356
        %v358 = vmul.f32 %v357, %v357
        %v359 = vsel %vm283, %v358, 0.0
        %360 = vadd.xlane.f32.xlu0 %v359
        %v361 = vpop.xlane.xlu0 %360
        %v362 = vmul.f32 %v361, %v355
        %v363 = vadd.f32 %v362, 1e-05
        %v364 = vrsqrt.pop %v363
        %v365 = vmul.f32 %v364, %v363
        %v366 = vmul.f32 %v365, %v364
        %v367 = vmul.f32 0.5, %v366
        %v368 = vsub.f32 1.5, %v367
        %v369 = vmul.f32 %v364, %v368
        %vm370 = vweird.f32 %v363
        %vm371 = vweird.f32 %v364
        %vm372 = vmor %vm370, %vm371
        %v373 = vsel %vm372, %v364, %v369
        %v374 = vmul.f32 %v357, %v373
        %v375 = vld [vmem:[%s5] sm:$0x1]
        %v377 = vperm.slane %v375, 0
        %v379 = vmul.f32 %v374, %v377
        %v380 = vld [vmem:[%s6] sm:$0x1]
        %v382 = vperm.slane %v380, 0
        %v384 = vadd.f32 %v379, %v382
        %385 = vst.msk [vmem:[%s269] sm:$0xff] %vm283, %v384
        %s386 = sand.u32 %s181, 1
        %s387 = scalar_lea.sflag [#allocation3], %s386
        %s388 = sand.u32 %s181, 1
        %s389 = smul.addr %s388, 8
        %s390 = scalar_lea.vmem [#allocation2], %s389
        // Predicated region
        $region49: #{relative_encoder_block.9} parent=47 // pred_check
          %p391 = pneg %p191
        $region50: #{relative_encoder_block.9} parent=47 // pred_check_branch
          %393 = sbr.rel (%p391) target = $region52
        $region51: #{relative_encoder_block.9} parent=47 // pred_region
          %395 = vsyncadd %s387, 0
          %s396 = smul.addr %s21, 8
          %s397 = scalar_lea.hbm %s7, %s396
          %s399 = sshll.u32 %s390, 4
          %s400 = int_to_ptr.vmem [resolvable:$true] %s399
          %s401 = sshll.u32 %s397, 4
          %s402 = int_to_ptr.hbm [resolvable:$true] %s401
          %404 = dma.vmem_to_hbm [thread:$0]  %s400, 128, %s402, %s387
        $region52: #{relative_encoder_block.9} parent=47 // pred_fallthru
          _
      $region48: #{relative_encoder_block.9} parent=5 // pred_fallthru
        _
      %p405 = scmp.le.s32.totalorder 2, %s16
      // Predicated region
      $region53: #{relative_encoder_block.9} parent=5 // pred_check
        %p406 = pneg %p405
      $region54: #{relative_encoder_block.9} parent=5 // pred_check_branch
        %408 = sbr.rel (%p406) target = $region56
      $region55: #{relative_encoder_block.9} parent=5 // pred_region
        %s409 = ssub.s32 %s16, 2
        // Predicated region
        $region57: #{relative_encoder_block.9} parent=55 // pred_check
          %p410 = pneg %p197
        $region58: #{relative_encoder_block.9} parent=55 // pred_check_branch
          %412 = sbr.rel (%p410) target = $region60
        $region59: #{relative_encoder_block.9} parent=55 // pred_region
          %s413 = sand.u32 %s182, 1
          %s414 = scalar_lea.sflag [#allocation3], %s413
          %s415 = sand.u32 %s182, 1
          %s416 = smul.addr %s415, 8
          %s417 = scalar_lea.vmem [#allocation2], %s416
          %419 = dma.done %s414, 128
        $region60: #{relative_encoder_block.9} parent=55 // pred_fallthru
          _
      $region56: #{relative_encoder_block.9} parent=5 // pred_fallthru
        _
    $region6: #{relative_encoder_block.9} parent=1 // loop_footer
      %s20 = sadd.s32 1, %s16
    $region7: #{relative_encoder_block.9} parent=1 // loop_footer_branch
      %15 = sbr.rel target = $region3
    $region8: #{relative_encoder_block.9} parent=1 // loop_exit
      _
    %420 = vsyncpa [#allocation3], 1
    %s421 = scalar_lea.sflag [#allocation3], 1
    %422 = vsyncpa %s421, 1

</llo_original>
